<compile_context>
chip_gen: v7x
topology: tpu7x:2x2x1
jax: 0.10.0
libtpu: 0.0.40
codegen_flags: <defaults>
</compile_context>

<pallas_src>
import math

import jax
import jax.numpy as jnp
from jax import lax
from jax.experimental import pallas as pl
from jax.experimental.pallas import tpu as pltpu

_EPS = 1e-5
_LANE = 128


def _ln_rows_kernel(x_ref, w_ref, b_ref, o_ref):
    """LayerNorm over the full trailing dim of the tile (C >= 128 / unpacked path)."""
    x = x_ref[...].astype(jnp.float32)
    mu = jnp.mean(x, axis=-1, keepdims=True)
    xc = x - mu
    var = jnp.mean(xc * xc, axis=-1, keepdims=True)        # biased variance
    inv = lax.rsqrt(var + _EPS)
    o_ref[...] = (xc * inv * w_ref[...] + b_ref[...]).astype(o_ref.dtype)


def _ln_packed_kernel(x_ref, w_ref, b_ref, a_ref, o_ref):
    """Lane-packed LayerNorm: each 128-lane row holds G = 128//C logical rows of size C.

    Per-segment mean/variance are computed with a block-diagonal averaging matrix on the
    MXU (full-precision f32 passes), keeping vregs and stores 128-lane dense (no vst.msk).
    """
    x = x_ref[...].astype(jnp.float32)
    a = a_ref[...]                                           # (128, 128) block-diag, entries 1/C
    mu = jnp.dot(x, a, preferred_element_type=jnp.float32,
                 precision=lax.Precision.HIGHEST)            # segment mean, broadcast in-segment
    xc = x - mu
    var = jnp.dot(xc * xc, a, preferred_element_type=jnp.float32,
                  precision=lax.Precision.HIGHEST)           # biased segment variance
    inv = lax.rsqrt(var + _EPS)
    o_ref[...] = (xc * inv * w_ref[...] + b_ref[...]).astype(o_ref.dtype)


def _sublane(dtype) -> int:
    # sublane packing: 8 rows for 4-byte, 16 for 2-byte, 32 for 1-byte dtypes
    return {4: 8, 2: 16, 1: 32}.get(jnp.dtype(dtype).itemsize, 8)


def _pick_tile_rows(rows, packed_c, dtype, budget_bytes=4 << 20):
    """Largest sublane-aligned row tile <= rows, ~budget_bytes per input tile, capped at 1024."""
    sub = _sublane(dtype)
    if rows <= sub:
        return max(rows, 1)                                  # block == full row extent (legal)
    itemsize = jnp.dtype(dtype).itemsize
    tr = budget_bytes // max(1, packed_c * itemsize)
    tr = min(tr, 1024, rows)
    tr = max(sub, (tr // sub) * sub)
    return tr


def withbias_layernorm(x, weight, bias):
    """Pallas equivalent of PyTorch WithBias_LayerNorm.forward.

    x: (..., C); weight, bias: (C,). Returns same shape/dtype as x.
    """
    orig_shape = x.shape
    C = orig_shape[-1]
    rows = math.prod(orig_shape[:-1])

    w32 = weight.astype(jnp.float32).reshape(1, C)
    b32 = bias.astype(jnp.float32).reshape(1, C)

    # Lane-dense packing: fold G = 128 // C rows into each 128-lane vreg row.
    pack = (C < _LANE) and (_LANE % C == 0) and (rows >= (_LANE // C)) and (rows % (_LANE // C) == 0)

    if pack:
        G = _LANE // C
        Cp = _LANE
        rows_v = rows // G
        x2 = x.reshape(rows_v, Cp)                           # contiguous reshape: no data movement
        w2 = jnp.tile(w32, (1, G))
        b2 = jnp.tile(b32, (1, G))
        seg = jnp.arange(Cp, dtype=jnp.int32) // C
        avg = jnp.where(seg[:, None] == seg[None, :],
                        jnp.float32(1.0 / C), jnp.float32(0.0))
        kernel = _ln_packed_kernel
        extra_inputs = (avg,)
        extra_specs = [pl.BlockSpec((Cp, Cp), lambda i: (0, 0))]
    else:
        Cp = C
        rows_v = rows
        x2 = x.reshape(rows_v, Cp)
        w2, b2 = w32, b32
        kernel = _ln_rows_kernel
        extra_inputs = ()
        extra_specs = []

    tile_rows = _pick_tile_rows(rows_v, Cp, x.dtype)
    grid = (pl.cdiv(rows_v, tile_rows),)

    # Double-buffered input + output tiles, params/avg matrix, plus slack.
    tile_bytes = tile_rows * Cp * jnp.dtype(x.dtype).itemsize
    vmem_limit = int(max(32 << 20, min(48 << 20, 4 * tile_bytes + (4 << 20))))

    out = pl.pallas_call(
        kernel,
        out_shape=jax.ShapeDtypeStruct((rows_v, Cp), x.dtype),
        grid_spec=pltpu.PrefetchScalarGridSpec(
            num_scalar_prefetch=0,
            grid=grid,
            in_specs=[
                pl.BlockSpec((tile_rows, Cp), lambda i: (i, 0)),
                pl.BlockSpec((1, Cp), lambda i: (0, 0)),
                pl.BlockSpec((1, Cp), lambda i: (0, 0)),
            ] + extra_specs,
            out_specs=pl.BlockSpec((tile_rows, Cp), lambda i: (i, 0)),
        ),
        compiler_params=pltpu.CompilerParams(
            dimension_semantics=("parallel",),
            vmem_limit_bytes=vmem_limit,
        ),
    )(x2, w2, b2, *extra_inputs)

    return out.reshape(orig_shape)


if __name__ == "__main__":
    key = jax.random.PRNGKey(0)

    def ref_ln(x, w, b):
        mu = jnp.mean(x, axis=-1, keepdims=True)
        var = jnp.mean((x - mu) ** 2, axis=-1, keepdims=True)
        return (x - mu) / jnp.sqrt(var + 1e-5) * w + b

    k1, k2, k3 = jax.random.split(key, 3)

    # Case 1: MSCA-style tokens (B, H*W, C) with C=32 < 128 -> lane-packed MXU path.
    B, N, C = 2, 64, 32
    x = jax.random.normal(k1, (B, N, C), dtype=jnp.float32)
    weight = jnp.ones((C,), dtype=jnp.float32)               # matches nn.Parameter(torch.ones)
    bias = jnp.zeros((C,), dtype=jnp.float32)                # matches nn.Parameter(torch.zeros)
    out = jax.block_until_ready(withbias_layernorm(x, weight, bias))
    ref = ref_ln(x, weight, bias)
    assert out.shape == x.shape and out.dtype == x.dtype
    assert float(jnp.max(jnp.abs(out - ref))) < 1e-4

    # Case 2: wide channels, row count not a multiple of the tile -> boundary-block path.
    C2 = 256
    x_b = jax.random.normal(k2, (2, 50, C2), dtype=jnp.float32)
    w_b = jax.random.normal(k3, (C2,), dtype=jnp.float32) * 0.1 + 1.0
    b_b = jnp.linspace(-1.0, 1.0, C2, dtype=jnp.float32)
    out_b = jax.block_until_ready(withbias_layernorm(x_b, w_b, b_b))
    ref_b = ref_ln(x_b, w_b, b_b)
    assert out_b.shape == x_b.shape and out_b.dtype == x_b.dtype
    assert float(jnp.max(jnp.abs(out_b - ref_b))) < 1e-4

    print("KERNEL_OK")
</pallas_src>

<mosaic_0001>
module attributes {stable_mosaic.version = 11 : i64} {
  func.func @_ln_packed_kernel(%arg0: i32, %arg1: memref<32x128xf32, #tpu.memory_space<vmem>>, %arg2: memref<1x128xf32, #tpu.memory_space<vmem>>, %arg3: memref<1x128xf32, #tpu.memory_space<vmem>>, %arg4: memref<128x128xf32, #tpu.memory_space<vmem>>, %arg5: memref<32x128xf32, #tpu.memory_space<vmem>>) attributes {dimension_semantics = [#tpu.dimension_semantics<parallel>], iteration_bounds = array<i64: 1>, scalar_prefetch = 0 : i64, scratch_operands = 0 : i64, tpu.core_type = #tpu.core_type<tc>, window_params = [{transform_indices = @transform_0, window_bounds = array<i64: 32, 128>}, {pipeline_mode = #tpu.pipeline_mode<synchronous>, transform_indices = @transform_1, window_bounds = array<i64: 1, 128>}, {pipeline_mode = #tpu.pipeline_mode<synchronous>, transform_indices = @transform_2, window_bounds = array<i64: 1, 128>}, {pipeline_mode = #tpu.pipeline_mode<synchronous>, transform_indices = @transform_3, window_bounds = array<i64: 128, 128>}, {transform_indices = @transform_4, window_bounds = array<i64: 32, 128>}]} {
    %c0 = arith.constant 0 : index
    %c0_0 = arith.constant 0 : index
    %0 = vector.load %arg1[%c0, %c0_0] : memref<32x128xf32, #tpu.memory_space<vmem>>, vector<32x128xf32>
    %c0_1 = arith.constant 0 : index
    %c0_2 = arith.constant 0 : index
    %1 = vector.load %arg4[%c0_1, %c0_2] : memref<128x128xf32, #tpu.memory_space<vmem>>, vector<128x128xf32>
    %cst = arith.constant dense<0.000000e+00> : vector<32x128xf32>
    %2 = tpu.matmul %0, %1, %cst {dimension_numbers = #tpu.dot_dimension_numbers<[1], [0], [0], [1], [0, 0, 1, 1], [], []>, precision = #tpu.contract_precision<fp32>} : vector<32x128xf32>, vector<128x128xf32>, vector<32x128xf32> -> vector<32x128xf32>
    %3 = arith.subf %0, %2 : vector<32x128xf32>
    %4 = arith.mulf %3, %3 : vector<32x128xf32>
    %cst_3 = arith.constant dense<0.000000e+00> : vector<32x128xf32>
    %5 = tpu.matmul %4, %1, %cst_3 {dimension_numbers = #tpu.dot_dimension_numbers<[1], [0], [0], [1], [0, 0, 1, 1], [], []>, precision = #tpu.contract_precision<fp32>} : vector<32x128xf32>, vector<128x128xf32>, vector<32x128xf32> -> vector<32x128xf32>
    %cst_4 = arith.constant 9.99999974E-6 : f32
    %6 = vector.broadcast %cst_4 : f32 to vector<32x128xf32>
    %7 = arith.addf %5, %6 : vector<32x128xf32>
    %8 = math.rsqrt %7 : vector<32x128xf32>
    %9 = arith.mulf %3, %8 : vector<32x128xf32>
    %c0_5 = arith.constant 0 : index
    %c0_6 = arith.constant 0 : index
    %10 = vector.load %arg2[%c0_5, %c0_6] : memref<1x128xf32, #tpu.memory_space<vmem>>, vector<1x128xf32>
    %11 = vector.broadcast %10 : vector<1x128xf32> to vector<32x128xf32>
    %12 = arith.mulf %9, %11 : vector<32x128xf32>
    %c0_7 = arith.constant 0 : index
    %c0_8 = arith.constant 0 : index
    %13 = vector.load %arg3[%c0_7, %c0_8] : memref<1x128xf32, #tpu.memory_space<vmem>>, vector<1x128xf32>
    %14 = vector.broadcast %13 : vector<1x128xf32> to vector<32x128xf32>
    %15 = arith.addf %12, %14 : vector<32x128xf32>
    %c0_9 = arith.constant 0 : index
    %c0_10 = arith.constant 0 : index
    %16 = vector.load %arg5[%c0_9, %c0_10] : memref<32x128xf32, #tpu.memory_space<vmem>>, vector<32x128xf32>
    tpu.vector_store %arg5[%c0_9, %c0_10], %15 {strides = array<i32>} : memref<32x128xf32, #tpu.memory_space<vmem>>, vector<32x128xf32>,
    return
  }
  func.func @transform_0(%arg0: i32) -> (i32, i32) {
    %c0_i32 = arith.constant 0 : i32
    %c0_i32_0 = arith.constant 0 : i32
    return %arg0, %c0_i32 : i32, i32
  }
  func.func @transform_1(%arg0: i32) -> (i32, i32) {
    %c0_i32 = arith.constant 0 : i32
    %c0_i32_0 = arith.constant 0 : i32
    %c0_i32_1 = arith.constant 0 : i32
    return %c0_i32, %c0_i32_0 : i32, i32
  }
  func.func @transform_2(%arg0: i32) -> (i32, i32) {
    %c0_i32 = arith.constant 0 : i32
    %c0_i32_0 = arith.constant 0 : i32
    %c0_i32_1 = arith.constant 0 : i32
    return %c0_i32, %c0_i32_0 : i32, i32
  }
  func.func @transform_3(%arg0: i32) -> (i32, i32) {
    %c0_i32 = arith.constant 0 : i32
    %c0_i32_0 = arith.constant 0 : i32
    %c0_i32_1 = arith.constant 0 : i32
    return %c0_i32, %c0_i32_0 : i32, i32
  }
  func.func @transform_4(%arg0: i32) -> (i32, i32) {
    %c0_i32 = arith.constant 0 : i32
    %c0_i32_0 = arith.constant 0 : i32
    return %arg0, %c0_i32 : i32, i32
  }
}

</mosaic_0001>

<llo_original>
// kernel: tpu_custom_call.1
$region0: #{tpu_custom_call.1}
  #allocation0 [shape = 'u32[]', space=smem, size = 0x4, offset = 0x4, fixed_abs, tag = 'smem constant byte address 0x4 - core index']
  #allocation1 [shape = 'u32[144,128]{1,0:T(1,128)}', space=vmem, size = 0x12000, scoped, tag = 'internal scratch']
  %s0 = inlined_call_operand.hbm [shape: f32[32,128], index: 0, kind: input, shape index: {}]
  %s1 = inlined_call_operand.vmem [shape: f32[1,128], index: 1, kind: input, shape index: {}]
  %s2 = inlined_call_operand.vmem [shape: f32[1,128], index: 2, kind: input, shape index: {}]
  %s3 = inlined_call_operand.hbm [shape: f32[128,128], index: 3, kind: input, shape index: {}]
  %s4 = inlined_call_operand.hbm [shape: f32[32,128], index: 4, kind: output, shape index: {}]
  %s5 = sld [smem:[#allocation0]]
  $region34: #{tpu_custom_call.1} parent=0
    _
  %s7 = ssub.s32 1, %s5
  %s8 = scalar_select 0, %s7, %s5
  $region1: #{tpu_custom_call.1} parent=0
    #allocation2 [shape = 'u8[16384]{0}', space=vmem, size = 0x4000, scoped, tag = 'input window, operand 0, single buffered']
    #allocation3 [shape = 's32[1]{0}', space=sflag, size = 0x4, scoped, tag = 'scoped memory for tpu_custom_call.1']
    #allocation4 [shape = 's32[1]{0}', space=sflag, size = 0x4, scoped, tag = 'scoped memory for tpu_custom_call.1']
    #allocation5 [shape = 'u8[65536]{0}', space=vmem, size = 0x10000, scoped, tag = 'input window, operand 3, single buffered']
    #allocation6 [shape = 's32[1]{0}', space=sflag, size = 0x4, scoped, tag = 'scoped memory for tpu_custom_call.1']
    #allocation7 [shape = 'u8[16384]{0}', space=vmem, size = 0x4000, scoped, tag = 'output window, operand 0, single buffered']
    %9 = vsyncpa [#allocation3], 0
    %10 = vsyncpa [#allocation6], 0
    %11 = vsyncpa [#allocation4], 0
    // Predicated region
    $region2: #{tpu_custom_call.1} parent=1 // pred_check
      _
    $region3: #{tpu_custom_call.1} parent=1 // pred_check_branch
      %13 = sbr.rel (0) target = $region5
    $region4: #{tpu_custom_call.1} parent=1 // pred_region
      %s15 = ssub.s32 512, 512
      %16 = vsyncadd [#allocation3], %s15
      %s17 = sshll.u32 [#allocation2], 4
      %s18 = int_to_ptr.vmem [resolvable:$true] %s17
      %23 = dma.hbm_to_vmem [thread:$0]  %s0, 512, %s18, [#allocation3], 128, 128, 8
    $region5: #{tpu_custom_call.1} parent=1 // pred_fallthru
      _
    // Predicated region
    $region6: #{tpu_custom_call.1} parent=1 // pred_check
      _
    $region7: #{tpu_custom_call.1} parent=1 // pred_check_branch
      %25 = sbr.rel (0) target = $region9
    $region8: #{tpu_custom_call.1} parent=1 // pred_region
      _
    $region9: #{tpu_custom_call.1} parent=1 // pred_fallthru
      _
    // Predicated region
    $region10: #{tpu_custom_call.1} parent=1 // pred_check
      _
    $region11: #{tpu_custom_call.1} parent=1 // pred_check_branch
      %27 = sbr.rel (0) target = $region13
    $region12: #{tpu_custom_call.1} parent=1 // pred_region
      _
    $region13: #{tpu_custom_call.1} parent=1 // pred_fallthru
      _
    // Predicated region
    $region14: #{tpu_custom_call.1} parent=1 // pred_check
      _
    $region15: #{tpu_custom_call.1} parent=1 // pred_check_branch
      %29 = sbr.rel (0) target = $region17
    $region16: #{tpu_custom_call.1} parent=1 // pred_region
      %s31 = ssub.s32 2048, 2048
      %32 = vsyncadd [#allocation6], %s31
      %s33 = sshll.u32 [#allocation5], 4
      %s34 = int_to_ptr.vmem [resolvable:$true] %s33
      %39 = dma.hbm_to_vmem [thread:$0]  %s3, 2048, %s34, [#allocation6], 128, 128, 8
    $region17: #{tpu_custom_call.1} parent=1 // pred_fallthru
      _
    // Predicated region
    $region18: #{tpu_custom_call.1} parent=1 // pred_check
      _
    $region19: #{tpu_custom_call.1} parent=1 // pred_check_branch
      %41 = sbr.rel (0) target = $region21
    $region20: #{tpu_custom_call.1} parent=1 // pred_region
      %42 = dma.done [#allocation3], 512
    $region21: #{tpu_custom_call.1} parent=1 // pred_fallthru
      _
    // Predicated region
    $region22: #{tpu_custom_call.1} parent=1 // pred_check
      _
    $region23: #{tpu_custom_call.1} parent=1 // pred_check_branch
      %44 = sbr.rel (0) target = $region25
    $region24: #{tpu_custom_call.1} parent=1 // pred_region
      %45 = dma.done [#allocation6], 2048
    $region25: #{tpu_custom_call.1} parent=1 // pred_fallthru
      _
    %v46 = vld [vmem:[#allocation2] sm:$0xff]
    %v47 = vld [vmem:[#allocation2 + $0x8] sm:$0xff]
    %v48 = vld [vmem:[#allocation2 + $0x10] sm:$0xff]
    %v49 = vld [vmem:[#allocation2 + $0x18] sm:$0xff]
    %v50 = vld [vmem:[#allocation5] sm:$0xff]
    %v51 = vld [vmem:[#allocation5 + $0x8] sm:$0xff]
    %v52 = vld [vmem:[#allocation5 + $0x10] sm:$0xff]
    %v53 = vld [vmem:[#allocation5 + $0x18] sm:$0xff]
    %v54 = vld [vmem:[#allocation5 + $0x20] sm:$0xff]
    %v55 = vld [vmem:[#allocation5 + $0x28] sm:$0xff]
    %v56 = vld [vmem:[#allocation5 + $0x30] sm:$0xff]
    %v57 = vld [vmem:[#allocation5 + $0x38] sm:$0xff]
    %v58 = vld [vmem:[#allocation5 + $0x40] sm:$0xff]
    %v59 = vld [vmem:[#allocation5 + $0x48] sm:$0xff]
    %v60 = vld [vmem:[#allocation5 + $0x50] sm:$0xff]
    %v61 = vld [vmem:[#allocation5 + $0x58] sm:$0xff]
    %v62 = vld [vmem:[#allocation5 + $0x60] sm:$0xff]
    %v63 = vld [vmem:[#allocation5 + $0x68] sm:$0xff]
    %v64 = vld [vmem:[#allocation5 + $0x70] sm:$0xff]
    %v65 = vld [vmem:[#allocation5 + $0x78] sm:$0xff]
    %66 = vmatprep.subr.mxu0 0.0
    %v67 = vand.u32 %v50, 4294901760
    %68 = vmatpush1.msra.mxu0 %v67
    %69 = vmatprep.subr.mxu0 0.0
    %v70 = vand.u32 %v51, 4294901760
    %71 = vmatpush1.msra.mxu0 %v70
    %72 = vmatprep.subr.mxu0 0.0
    %v73 = vand.u32 %v52, 4294901760
    %74 = vmatpush1.msra.mxu0 %v73
    %75 = vmatprep.subr.mxu0 0.0
    %v76 = vand.u32 %v53, 4294901760
    %77 = vmatpush1.msra.mxu0 %v76
    %78 = vmatprep.subr.mxu0 0.0
    %v79 = vand.u32 %v54, 4294901760
    %80 = vmatpush1.msra.mxu0 %v79
    %81 = vmatprep.subr.mxu0 0.0
    %v82 = vand.u32 %v55, 4294901760
    %83 = vmatpush1.msra.mxu0 %v82
    %84 = vmatprep.subr.mxu0 0.0
    %v85 = vand.u32 %v56, 4294901760
    %86 = vmatpush1.msra.mxu0 %v85
    %87 = vmatprep.subr.mxu0 0.0
    %v88 = vand.u32 %v57, 4294901760
    %89 = vmatpush1.msra.mxu0 %v88
    %90 = vmatprep.subr.mxu0 0.0
    %v91 = vand.u32 %v58, 4294901760
    %92 = vmatpush1.msra.mxu0 %v91
    %93 = vmatprep.subr.mxu0 0.0
    %v94 = vand.u32 %v59, 4294901760
    %95 = vmatpush1.msra.mxu0 %v94
    %96 = vmatprep.subr.mxu0 0.0
    %v97 = vand.u32 %v60, 4294901760
    %98 = vmatpush1.msra.mxu0 %v97
    %99 = vmatprep.subr.mxu0 0.0
    %v100 = vand.u32 %v61, 4294901760
    %101 = vmatpush1.msra.mxu0 %v100
    %102 = vmatprep.subr.mxu0 0.0
    %v103 = vand.u32 %v62, 4294901760
    %104 = vmatpush1.msra.mxu0 %v103
    %105 = vmatprep.subr.mxu0 0.0
    %v106 = vand.u32 %v63, 4294901760
    %107 = vmatpush1.msra.mxu0 %v106
    %108 = vmatprep.subr.mxu0 0.0
    %v109 = vand.u32 %v64, 4294901760
    %110 = vmatpush1.msra.mxu0 %v109
    %111 = vmatprep.subr.mxu0 0.0
    %v112 = vand.u32 %v65, 4294901760
    %113 = vmatpush1.msra.mxu0 %v112
    %114 = vmatprep.subr.mxu0 0.0
    %115 = vmatpush1.msra.mxu0 0.0
    %116 = vmatprep.subr.mxu0 0.0
    %117 = vmatpush1.msra.mxu0 0.0
    %118 = vmatprep.subr.mxu0 0.0
    %119 = vmatpush1.msra.mxu0 0.0
    %120 = vmatprep.subr.mxu0 0.0
    %121 = vmatpush1.msra.mxu0 0.0
    %122 = vmatprep.subr.mxu0 0.0
    %123 = vmatpush1.msra.mxu0 0.0
    %124 = vmatprep.subr.mxu0 0.0
    %125 = vmatpush1.msra.mxu0 0.0
    %126 = vmatprep.subr.mxu0 0.0
    %127 = vmatpush1.msra.mxu0 0.0
    %128 = vmatprep.subr.mxu0 0.0
    %129 = vmatpush1.msra.mxu0 0.0
    %130 = vmatprep.subr.mxu0 0.0
    %131 = vmatpush1.msra.mxu0 0.0
    %132 = vmatprep.subr.mxu0 0.0
    %133 = vmatpush1.msra.mxu0 0.0
    %134 = vmatprep.subr.mxu0 0.0
    %135 = vmatpush1.msra.mxu0 0.0
    %136 = vmatprep.subr.mxu0 0.0
    %137 = vmatpush1.msra.mxu0 0.0
    %138 = vmatprep.subr.mxu0 0.0
    %139 = vmatpush1.msra.mxu0 0.0
    %140 = vmatprep.subr.mxu0 0.0
    %141 = vmatpush1.msra.mxu0 0.0
    %142 = vmatprep.subr.mxu0 0.0
    %143 = vmatpush1.msra.mxu0 0.0
    %144 = vmatprep.subr.mxu0 0.0
    %145 = vmatpush1.msra.mxu0 0.0
    %146 = vmatprep.mubr.f32.mxu0 0.0
    %v147 = vand.u32 %v46, 4294901760
    %v148 = vsub.f32 %v46, %v147
    %v149 = vand.u32 %v148, 4294901760
    %v150 = vsub.f32 %v148, %v149
    %v151 = vand.u32 %v150, 4294901760
    %152 = vmatmul.mubr.f32.gmra.mrb[0].mxu0 %v151
    %v153 = vpop.f32.mrb[0].mxu0
    %v154 = vadd.f32 0.0, %v153
    %v155 = vpop.f32.mrb[0].mxu0
    %156 = vmatprep.mubr.f32.mxu0 0.0
    %v157 = vand.u32 %v47, 4294901760
    %v158 = vsub.f32 %v47, %v157
    %v159 = vand.u32 %v158, 4294901760
    %v160 = vsub.f32 %v158, %v159
    %v161 = vand.u32 %v160, 4294901760
    %162 = vmatmul.mubr.f32.gmra.mrb[0].mxu0 %v161
    %v163 = vpop.f32.mrb[0].mxu0
    %v164 = vadd.f32 0.0, %v163
    %v165 = vpop.f32.mrb[0].mxu0
    %166 = vmatprep.mubr.f32.mxu0 0.0
    %v167 = vand.u32 %v48, 4294901760
    %v168 = vsub.f32 %v48, %v167
    %v169 = vand.u32 %v168, 4294901760
    %v170 = vsub.f32 %v168, %v169
    %v171 = vand.u32 %v170, 4294901760
    %172 = vmatmul.mubr.f32.gmra.mrb[0].mxu0 %v171
    %v173 = vpop.f32.mrb[0].mxu0
    %v174 = vadd.f32 0.0, %v173
    %v175 = vpop.f32.mrb[0].mxu0
    %176 = vmatprep.mubr.f32.mxu0 0.0
    %v177 = vand.u32 %v49, 4294901760
    %v178 = vsub.f32 %v49, %v177
    %v179 = vand.u32 %v178, 4294901760
    %v180 = vsub.f32 %v178, %v179
    %v181 = vand.u32 %v180, 4294901760
    %182 = vmatmul.mubr.f32.gmra.mrb[0].mxu0 %v181
    %v183 = vpop.f32.mrb[0].mxu0
    %v184 = vadd.f32 0.0, %v183
    %v185 = vpop.f32.mrb[0].mxu0
    %186 = vdwg.mxu0
    %187 = vmatprep.subr.mxu0 0.0
    %v188 = vand.u32 %v50, 4294901760
    %v189 = vsub.f32 %v50, %v188
    %v190 = vand.u32 %v189, 4294901760
    %v191 = vsub.f32 %v189, %v190
    %v192 = vand.u32 %v191, 4294901760
    %193 = vmatpush1.msra.mxu0 %v192
    %194 = vmatprep.subr.mxu0 0.0
    %v195 = vand.u32 %v51, 4294901760
    %v196 = vsub.f32 %v51, %v195
    %v197 = vand.u32 %v196, 4294901760
    %v198 = vsub.f32 %v196, %v197
    %v199 = vand.u32 %v198, 4294901760
    %200 = vmatpush1.msra.mxu0 %v199
    %201 = vmatprep.subr.mxu0 0.0
    %v202 = vand.u32 %v52, 4294901760
    %v203 = vsub.f32 %v52, %v202
    %v204 = vand.u32 %v203, 4294901760
    %v205 = vsub.f32 %v203, %v204
    %v206 = vand.u32 %v205, 4294901760
    %207 = vmatpush1.msra.mxu0 %v206
    %208 = vmatprep.subr.mxu0 0.0
    %v209 = vand.u32 %v53, 4294901760
    %v210 = vsub.f32 %v53, %v209
    %v211 = vand.u32 %v210, 4294901760
    %v212 = vsub.f32 %v210, %v211
    %v213 = vand.u32 %v212, 4294901760
    %214 = vmatpush1.msra.mxu0 %v213
    %215 = vmatprep.subr.mxu0 0.0
    %v216 = vand.u32 %v54, 4294901760
    %v217 = vsub.f32 %v54, %v216
    %v218 = vand.u32 %v217, 4294901760
    %v219 = vsub.f32 %v217, %v218
    %v220 = vand.u32 %v219, 4294901760
    %221 = vmatpush1.msra.mxu0 %v220
    %222 = vmatprep.subr.mxu0 0.0
    %v223 = vand.u32 %v55, 4294901760
    %v224 = vsub.f32 %v55, %v223
    %v225 = vand.u32 %v224, 4294901760
    %v226 = vsub.f32 %v224, %v225
    %v227 = vand.u32 %v226, 4294901760
    %228 = vmatpush1.msra.mxu0 %v227
    %229 = vmatprep.subr.mxu0 0.0
    %v230 = vand.u32 %v56, 4294901760
    %v231 = vsub.f32 %v56, %v230
    %v232 = vand.u32 %v231, 4294901760
    %v233 = vsub.f32 %v231, %v232
    %v234 = vand.u32 %v233, 4294901760
    %235 = vmatpush1.msra.mxu0 %v234
    %236 = vmatprep.subr.mxu0 0.0
    %v237 = vand.u32 %v57, 4294901760
    %v238 = vsub.f32 %v57, %v237
    %v239 = vand.u32 %v238, 4294901760
    %v240 = vsub.f32 %v238, %v239
    %v241 = vand.u32 %v240, 4294901760
    %242 = vmatpush1.msra.mxu0 %v241
    %243 = vmatprep.subr.mxu0 0.0
    %v244 = vand.u32 %v58, 4294901760
    %v245 = vsub.f32 %v58, %v244
    %v246 = vand.u32 %v245, 4294901760
    %v247 = vsub.f32 %v245, %v246
    %v248 = vand.u32 %v247, 4294901760
    %249 = vmatpush1.msra.mxu0 %v248
    %250 = vmatprep.subr.mxu0 0.0
    %v251 = vand.u32 %v59, 4294901760
    %v252 = vsub.f32 %v59, %v251
    %v253 = vand.u32 %v252, 4294901760
    %v254 = vsub.f32 %v252, %v253
    %v255 = vand.u32 %v254, 4294901760
    %256 = vmatpush1.msra.mxu0 %v255
    %257 = vmatprep.subr.mxu0 0.0
    %v258 = vand.u32 %v60, 4294901760
    %v259 = vsub.f32 %v60, %v258
    %v260 = vand.u32 %v259, 4294901760
    %v261 = vsub.f32 %v259, %v260
    %v262 = vand.u32 %v261, 4294901760
    %263 = vmatpush1.msra.mxu0 %v262
    %264 = vmatprep.subr.mxu0 0.0
    %v265 = vand.u32 %v61, 4294901760
    %v266 = vsub.f32 %v61, %v265
    %v267 = vand.u32 %v266, 4294901760
    %v268 = vsub.f32 %v266, %v267
    %v269 = vand.u32 %v268, 4294901760
    %270 = vmatpush1.msra.mxu0 %v269
    %271 = vmatprep.subr.mxu0 0.0
    %v272 = vand.u32 %v62, 4294901760
    %v273 = vsub.f32 %v62, %v272
    %v274 = vand.u32 %v273, 4294901760
    %v275 = vsub.f32 %v273, %v274
    %v276 = vand.u32 %v275, 4294901760
    %277 = vmatpush1.msra.mxu0 %v276
    %278 = vmatprep.subr.mxu0 0.0
    %v279 = vand.u32 %v63, 4294901760
    %v280 = vsub.f32 %v63, %v279
    %v281 = vand.u32 %v280, 4294901760
    %v282 = vsub.f32 %v280, %v281
    %v283 = vand.u32 %v282, 4294901760
    %284 = vmatpush1.msra.mxu0 %v283
    %285 = vmatprep.subr.mxu0 0.0
    %v286 = vand.u32 %v64, 4294901760
    %v287 = vsub.f32 %v64, %v286
    %v288 = vand.u32 %v287, 4294901760
    %v289 = vsub.f32 %v287, %v288
    %v290 = vand.u32 %v289, 4294901760
    %291 = vmatpush1.msra.mxu0 %v290
    %292 = vmatprep.subr.mxu0 0.0
    %v293 = vand.u32 %v65, 4294901760
    %v294 = vsub.f32 %v65, %v293
    %v295 = vand.u32 %v294, 4294901760
    %v296 = vsub.f32 %v294, %v295
    %v297 = vand.u32 %v296, 4294901760
    %298 = vmatpush1.msra.mxu0 %v297
    %299 = vmatprep.subr.mxu0 0.0
    %300 = vmatpush1.msra.mxu0 0.0
    %301 = vmatprep.subr.mxu0 0.0
    %302 = vmatpush1.msra.mxu0 0.0
    %303 = vmatprep.subr.mxu0 0.0
    %304 = vmatpush1.msra.mxu0 0.0
    %305 = vmatprep.subr.mxu0 0.0
    %306 = vmatpush1.msra.mxu0 0.0
    %307 = vmatprep.subr.mxu0 0.0
    %308 = vmatpush1.msra.mxu0 0.0
    %309 = vmatprep.subr.mxu0 0.0
    %310 = vmatpush1.msra.mxu0 0.0
    %311 = vmatprep.subr.mxu0 0.0
    %312 = vmatpush1.msra.mxu0 0.0
    %313 = vmatprep.subr.mxu0 0.0
    %314 = vmatpush1.msra.mxu0 0.0
    %315 = vmatprep.subr.mxu0 0.0
    %316 = vmatpush1.msra.mxu0 0.0
    %317 = vmatprep.subr.mxu0 0.0
    %318 = vmatpush1.msra.mxu0 0.0
    %319 = vmatprep.subr.mxu0 0.0
    %320 = vmatpush1.msra.mxu0 0.0
    %321 = vmatprep.subr.mxu0 0.0
    %322 = vmatpush1.msra.mxu0 0.0
    %323 = vmatprep.subr.mxu0 0.0
    %324 = vmatpush1.msra.mxu0 0.0
    %325 = vmatprep.subr.mxu0 0.0
    %326 = vmatpush1.msra.mxu0 0.0
    %327 = vmatprep.subr.mxu0 0.0
    %328 = vmatpush1.msra.mxu0 0.0
    %329 = vmatprep.subr.mxu0 0.0
    %330 = vmatpush1.msra.mxu0 0.0
    %331 = vmatprep.mubr.f32.mxu0 0.0
    %v332 = vand.u32 %v46, 4294901760
    %333 = vmatmul.mubr.f32.gmra.mrb[0].mxu0 %v332
    %v334 = vpop.f32.mrb[0].mxu0
    %v335 = vadd.f32 %v154, %v334
    %v336 = vpop.f32.mrb[0].mxu0
    %337 = vmatprep.mubr.f32.mxu0 0.0
    %v338 = vand.u32 %v47, 4294901760
    %339 = vmatmul.mubr.f32.gmra.mrb[0].mxu0 %v338
    %v340 = vpop.f32.mrb[0].mxu0
    %v341 = vadd.f32 %v164, %v340
    %v342 = vpop.f32.mrb[0].mxu0
    %343 = vmatprep.mubr.f32.mxu0 0.0
    %v344 = vand.u32 %v48, 4294901760
    %345 = vmatmul.mubr.f32.gmra.mrb[0].mxu0 %v344
    %v346 = vpop.f32.mrb[0].mxu0
    %v347 = vadd.f32 %v174, %v346
    %v348 = vpop.f32.mrb[0].mxu0
    %349 = vmatprep.mubr.f32.mxu0 0.0
    %v350 = vand.u32 %v49, 4294901760
    %351 = vmatmul.mubr.f32.gmra.mrb[0].mxu0 %v350
    %v352 = vpop.f32.mrb[0].mxu0
    %v353 = vadd.f32 %v184, %v352
    %v354 = vpop.f32.mrb[0].mxu0
    %355 = vdwg.mxu0
    %356 = vmatprep.subr.mxu0 0.0
    %v357 = vand.u32 %v50, 4294901760
    %v358 = vsub.f32 %v50, %v357
    %359 = vmatpush1.msra.mxu0 %v358
    %360 = vmatprep.subr.mxu0 0.0
    %v361 = vand.u32 %v51, 4294901760
    %v362 = vsub.f32 %v51, %v361
    %363 = vmatpush1.msra.mxu0 %v362
    %364 = vmatprep.subr.mxu0 0.0
    %v365 = vand.u32 %v52, 4294901760
    %v366 = vsub.f32 %v52, %v365
    %367 = vmatpush1.msra.mxu0 %v366
    %368 = vmatprep.subr.mxu0 0.0
    %v369 = vand.u32 %v53, 4294901760
    %v370 = vsub.f32 %v53, %v369
    %371 = vmatpush1.msra.mxu0 %v370
    %372 = vmatprep.subr.mxu0 0.0
    %v373 = vand.u32 %v54, 4294901760
    %v374 = vsub.f32 %v54, %v373
    %375 = vmatpush1.msra.mxu0 %v374
    %376 = vmatprep.subr.mxu0 0.0
    %v377 = vand.u32 %v55, 4294901760
    %v378 = vsub.f32 %v55, %v377
    %379 = vmatpush1.msra.mxu0 %v378
    %380 = vmatprep.subr.mxu0 0.0
    %v381 = vand.u32 %v56, 4294901760
    %v382 = vsub.f32 %v56, %v381
    %383 = vmatpush1.msra.mxu0 %v382
    %384 = vmatprep.subr.mxu0 0.0
    %v385 = vand.u32 %v57, 4294901760
    %v386 = vsub.f32 %v57, %v385
    %387 = vmatpush1.msra.mxu0 %v386
    %388 = vmatprep.subr.mxu0 0.0
    %v389 = vand.u32 %v58, 4294901760
    %v390 = vsub.f32 %v58, %v389
    %391 = vmatpush1.msra.mxu0 %v390
    %392 = vmatprep.subr.mxu0 0.0
    %v393 = vand.u32 %v59, 4294901760
    %v394 = vsub.f32 %v59, %v393
    %395 = vmatpush1.msra.mxu0 %v394
    %396 = vmatprep.subr.mxu0 0.0
    %v397 = vand.u32 %v60, 4294901760
    %v398 = vsub.f32 %v60, %v397
    %399 = vmatpush1.msra.mxu0 %v398
    %400 = vmatprep.subr.mxu0 0.0
    %v401 = vand.u32 %v61, 4294901760
    %v402 = vsub.f32 %v61, %v401
    %403 = vmatpush1.msra.mxu0 %v402
    %404 = vmatprep.subr.mxu0 0.0
    %v405 = vand.u32 %v62, 4294901760
    %v406 = vsub.f32 %v62, %v405
    %407 = vmatpush1.msra.mxu0 %v406
    %408 = vmatprep.subr.mxu0 0.0
    %v409 = vand.u32 %v63, 4294901760
    %v410 = vsub.f32 %v63, %v409
    %411 = vmatpush1.msra.mxu0 %v410
    %412 = vmatprep.subr.mxu0 0.0
    %v413 = vand.u32 %v64, 4294901760
    %v414 = vsub.f32 %v64, %v413
    %415 = vmatpush1.msra.mxu0 %v414
    %416 = vmatprep.subr.mxu0 0.0
    %v417 = vand.u32 %v65, 4294901760
    %v418 = vsub.f32 %v65, %v417
    %419 = vmatpush1.msra.mxu0 %v418
    %420 = vmatprep.subr.mxu0 0.0
    %421 = vmatpush1.msra.mxu0 0.0
    %422 = vmatprep.subr.mxu0 0.0
    %423 = vmatpush1.msra.mxu0 0.0
    %424 = vmatprep.subr.mxu0 0.0
    %425 = vmatpush1.msra.mxu0 0.0
    %426 = vmatprep.subr.mxu0 0.0
    %427 = vmatpush1.msra.mxu0 0.0
    %428 = vmatprep.subr.mxu0 0.0
    %429 = vmatpush1.msra.mxu0 0.0
    %430 = vmatprep.subr.mxu0 0.0
    %431 = vmatpush1.msra.mxu0 0.0
    %432 = vmatprep.subr.mxu0 0.0
    %433 = vmatpush1.msra.mxu0 0.0
    %434 = vmatprep.subr.mxu0 0.0
    %435 = vmatpush1.msra.mxu0 0.0
    %436 = vmatprep.subr.mxu0 0.0
    %437 = vmatpush1.msra.mxu0 0.0
    %438 = vmatprep.subr.mxu0 0.0
    %439 = vmatpush1.msra.mxu0 0.0
    %440 = vmatprep.subr.mxu0 0.0
    %441 = vmatpush1.msra.mxu0 0.0
    %442 = vmatprep.subr.mxu0 0.0
    %443 = vmatpush1.msra.mxu0 0.0
    %444 = vmatprep.subr.mxu0 0.0
    %445 = vmatpush1.msra.mxu0 0.0
    %446 = vmatprep.subr.mxu0 0.0
    %447 = vmatpush1.msra.mxu0 0.0
    %448 = vmatprep.subr.mxu0 0.0
    %449 = vmatpush1.msra.mxu0 0.0
    %450 = vmatprep.subr.mxu0 0.0
    %451 = vmatpush1.msra.mxu0 0.0
    %452 = vmatprep.mubr.f32.mxu0 0.0
    %v453 = vand.u32 %v46, 4294901760
    %v454 = vsub.f32 %v46, %v453
    %455 = vmatmul.mubr.f32.gmra.mrb[0].mxu0 %v454
    %v456 = vpop.f32.mrb[0].mxu0
    %v457 = vadd.f32 %v335, %v456
    %v458 = vpop.f32.mrb[0].mxu0
    %459 = vmatprep.mubr.f32.mxu0 0.0
    %v460 = vand.u32 %v47, 4294901760
    %v461 = vsub.f32 %v47, %v460
    %462 = vmatmul.mubr.f32.gmra.mrb[0].mxu0 %v461
    %v463 = vpop.f32.mrb[0].mxu0
    %v464 = vadd.f32 %v341, %v463
    %v465 = vpop.f32.mrb[0].mxu0
    %466 = vmatprep.mubr.f32.mxu0 0.0
    %v467 = vand.u32 %v48, 4294901760
    %v468 = vsub.f32 %v48, %v467
    %469 = vmatmul.mubr.f32.gmra.mrb[0].mxu0 %v468
    %v470 = vpop.f32.mrb[0].mxu0
    %v471 = vadd.f32 %v347, %v470
    %v472 = vpop.f32.mrb[0].mxu0
    %473 = vmatprep.mubr.f32.mxu0 0.0
    %v474 = vand.u32 %v49, 4294901760
    %v475 = vsub.f32 %v49, %v474
    %476 = vmatmul.mubr.f32.gmra.mrb[0].mxu0 %v475
    %v477 = vpop.f32.mrb[0].mxu0
    %v478 = vadd.f32 %v353, %v477
    %v479 = vpop.f32.mrb[0].mxu0
    %480 = vdwg.mxu0
    %481 = vmatprep.subr.mxu0 0.0
    %v482 = vand.u32 %v50, 4294901760
    %483 = vmatpush1.msra.mxu0 %v482
    %484 = vmatprep.subr.mxu0 0.0
    %v485 = vand.u32 %v51, 4294901760
    %486 = vmatpush1.msra.mxu0 %v485
    %487 = vmatprep.subr.mxu0 0.0
    %v488 = vand.u32 %v52, 4294901760
    %489 = vmatpush1.msra.mxu0 %v488
    %490 = vmatprep.subr.mxu0 0.0
    %v491 = vand.u32 %v53, 4294901760
    %492 = vmatpush1.msra.mxu0 %v491
    %493 = vmatprep.subr.mxu0 0.0
    %v494 = vand.u32 %v54, 4294901760
    %495 = vmatpush1.msra.mxu0 %v494
    %496 = vmatprep.subr.mxu0 0.0
    %v497 = vand.u32 %v55, 4294901760
    %498 = vmatpush1.msra.mxu0 %v497
    %499 = vmatprep.subr.mxu0 0.0
    %v500 = vand.u32 %v56, 4294901760
    %501 = vmatpush1.msra.mxu0 %v500
    %502 = vmatprep.subr.mxu0 0.0
    %v503 = vand.u32 %v57, 4294901760
    %504 = vmatpush1.msra.mxu0 %v503
    %505 = vmatprep.subr.mxu0 0.0
    %v506 = vand.u32 %v58, 4294901760
    %507 = vmatpush1.msra.mxu0 %v506
    %508 = vmatprep.subr.mxu0 0.0
    %v509 = vand.u32 %v59, 4294901760
    %510 = vmatpush1.msra.mxu0 %v509
    %511 = vmatprep.subr.mxu0 0.0
    %v512 = vand.u32 %v60, 4294901760
    %513 = vmatpush1.msra.mxu0 %v512
    %514 = vmatprep.subr.mxu0 0.0
    %v515 = vand.u32 %v61, 4294901760
    %516 = vmatpush1.msra.mxu0 %v515
    %517 = vmatprep.subr.mxu0 0.0
    %v518 = vand.u32 %v62, 4294901760
    %519 = vmatpush1.msra.mxu0 %v518
    %520 = vmatprep.subr.mxu0 0.0
    %v521 = vand.u32 %v63, 4294901760
    %522 = vmatpush1.msra.mxu0 %v521
    %523 = vmatprep.subr.mxu0 0.0
    %v524 = vand.u32 %v64, 4294901760
    %525 = vmatpush1.msra.mxu0 %v524
    %526 = vmatprep.subr.mxu0 0.0
    %v527 = vand.u32 %v65, 4294901760
    %528 = vmatpush1.msra.mxu0 %v527
    %529 = vmatprep.subr.mxu0 0.0
    %530 = vmatpush1.msra.mxu0 0.0
    %531 = vmatprep.subr.mxu0 0.0
    %532 = vmatpush1.msra.mxu0 0.0
    %533 = vmatprep.subr.mxu0 0.0
    %534 = vmatpush1.msra.mxu0 0.0
    %535 = vmatprep.subr.mxu0 0.0
    %536 = vmatpush1.msra.mxu0 0.0
    %537 = vmatprep.subr.mxu0 0.0
    %538 = vmatpush1.msra.mxu0 0.0
    %539 = vmatprep.subr.mxu0 0.0
    %540 = vmatpush1.msra.mxu0 0.0
    %541 = vmatprep.subr.mxu0 0.0
    %542 = vmatpush1.msra.mxu0 0.0
    %543 = vmatprep.subr.mxu0 0.0
    %544 = vmatpush1.msra.mxu0 0.0
    %545 = vmatprep.subr.mxu0 0.0
    %546 = vmatpush1.msra.mxu0 0.0
    %547 = vmatprep.subr.mxu0 0.0
    %548 = vmatpush1.msra.mxu0 0.0
    %549 = vmatprep.subr.mxu0 0.0
    %550 = vmatpush1.msra.mxu0 0.0
    %551 = vmatprep.subr.mxu0 0.0
    %552 = vmatpush1.msra.mxu0 0.0
    %553 = vmatprep.subr.mxu0 0.0
    %554 = vmatpush1.msra.mxu0 0.0
    %555 = vmatprep.subr.mxu0 0.0
    %556 = vmatpush1.msra.mxu0 0.0
    %557 = vmatprep.subr.mxu0 0.0
    %558 = vmatpush1.msra.mxu0 0.0
    %559 = vmatprep.subr.mxu0 0.0
    %560 = vmatpush1.msra.mxu0 0.0
    %561 = vmatprep.mubr.f32.mxu0 0.0
    %v562 = vand.u32 %v46, 4294901760
    %v563 = vsub.f32 %v46, %v562
    %v564 = vand.u32 %v563, 4294901760
    %565 = vmatmul.mubr.f32.gmra.mrb[0].mxu0 %v564
    %v566 = vpop.f32.mrb[0].mxu0
    %v567 = vadd.f32 %v457, %v566
    %v568 = vpop.f32.mrb[0].mxu0
    %569 = vmatprep.mubr.f32.mxu0 0.0
    %v570 = vand.u32 %v47, 4294901760
    %v571 = vsub.f32 %v47, %v570
    %v572 = vand.u32 %v571, 4294901760
    %573 = vmatmul.mubr.f32.gmra.mrb[0].mxu0 %v572
    %v574 = vpop.f32.mrb[0].mxu0
    %v575 = vadd.f32 %v464, %v574
    %v576 = vpop.f32.mrb[0].mxu0
    %577 = vmatprep.mubr.f32.mxu0 0.0
    %v578 = vand.u32 %v48, 4294901760
    %v579 = vsub.f32 %v48, %v578
    %v580 = vand.u32 %v579, 4294901760
    %581 = vmatmul.mubr.f32.gmra.mrb[0].mxu0 %v580
    %v582 = vpop.f32.mrb[0].mxu0
    %v583 = vadd.f32 %v471, %v582
    %v584 = vpop.f32.mrb[0].mxu0
    %585 = vmatprep.mubr.f32.mxu0 0.0
    %v586 = vand.u32 %v49, 4294901760
    %v587 = vsub.f32 %v49, %v586
    %v588 = vand.u32 %v587, 4294901760
    %589 = vmatmul.mubr.f32.gmra.mrb[0].mxu0 %v588
    %v590 = vpop.f32.mrb[0].mxu0
    %v591 = vadd.f32 %v478, %v590
    %v592 = vpop.f32.mrb[0].mxu0
    %593 = vdwg.mxu0
    %594 = vmatprep.subr.mxu0 0.0
    %v595 = vand.u32 %v50, 4294901760
    %v596 = vsub.f32 %v50, %v595
    %v597 = vand.u32 %v596, 4294901760
    %598 = vmatpush1.msra.mxu0 %v597
    %599 = vmatprep.subr.mxu0 0.0
    %v600 = vand.u32 %v51, 4294901760
    %v601 = vsub.f32 %v51, %v600
    %v602 = vand.u32 %v601, 4294901760
    %603 = vmatpush1.msra.mxu0 %v602
    %604 = vmatprep.subr.mxu0 0.0
    %v605 = vand.u32 %v52, 4294901760
    %v606 = vsub.f32 %v52, %v605
    %v607 = vand.u32 %v606, 4294901760
    %608 = vmatpush1.msra.mxu0 %v607
    %609 = vmatprep.subr.mxu0 0.0
    %v610 = vand.u32 %v53, 4294901760
    %v611 = vsub.f32 %v53, %v610
    %v612 = vand.u32 %v611, 4294901760
    %613 = vmatpush1.msra.mxu0 %v612
    %614 = vmatprep.subr.mxu0 0.0
    %v615 = vand.u32 %v54, 4294901760
    %v616 = vsub.f32 %v54, %v615
    %v617 = vand.u32 %v616, 4294901760
    %618 = vmatpush1.msra.mxu0 %v617
    %619 = vmatprep.subr.mxu0 0.0
    %v620 = vand.u32 %v55, 4294901760
    %v621 = vsub.f32 %v55, %v620
    %v622 = vand.u32 %v621, 4294901760
    %623 = vmatpush1.msra.mxu0 %v622
    %624 = vmatprep.subr.mxu0 0.0
    %v625 = vand.u32 %v56, 4294901760
    %v626 = vsub.f32 %v56, %v625
    %v627 = vand.u32 %v626, 4294901760
    %628 = vmatpush1.msra.mxu0 %v627
    %629 = vmatprep.subr.mxu0 0.0
    %v630 = vand.u32 %v57, 4294901760
    %v631 = vsub.f32 %v57, %v630
    %v632 = vand.u32 %v631, 4294901760
    %633 = vmatpush1.msra.mxu0 %v632
    %634 = vmatprep.subr.mxu0 0.0
    %v635 = vand.u32 %v58, 4294901760
    %v636 = vsub.f32 %v58, %v635
    %v637 = vand.u32 %v636, 4294901760
    %638 = vmatpush1.msra.mxu0 %v637
    %639 = vmatprep.subr.mxu0 0.0
    %v640 = vand.u32 %v59, 4294901760
    %v641 = vsub.f32 %v59, %v640
    %v642 = vand.u32 %v641, 4294901760
    %643 = vmatpush1.msra.mxu0 %v642
    %644 = vmatprep.subr.mxu0 0.0
    %v645 = vand.u32 %v60, 4294901760
    %v646 = vsub.f32 %v60, %v645
    %v647 = vand.u32 %v646, 4294901760
    %648 = vmatpush1.msra.mxu0 %v647
    %649 = vmatprep.subr.mxu0 0.0
    %v650 = vand.u32 %v61, 4294901760
    %v651 = vsub.f32 %v61, %v650
    %v652 = vand.u32 %v651, 4294901760
    %653 = vmatpush1.msra.mxu0 %v652
    %654 = vmatprep.subr.mxu0 0.0
    %v655 = vand.u32 %v62, 4294901760
    %v656 = vsub.f32 %v62, %v655
    %v657 = vand.u32 %v656, 4294901760
    %658 = vmatpush1.msra.mxu0 %v657
    %659 = vmatprep.subr.mxu0 0.0
    %v660 = vand.u32 %v63, 4294901760
    %v661 = vsub.f32 %v63, %v660
    %v662 = vand.u32 %v661, 4294901760
    %663 = vmatpush1.msra.mxu0 %v662
    %664 = vmatprep.subr.mxu0 0.0
    %v665 = vand.u32 %v64, 4294901760
    %v666 = vsub.f32 %v64, %v665
    %v667 = vand.u32 %v666, 4294901760
    %668 = vmatpush1.msra.mxu0 %v667
    %669 = vmatprep.subr.mxu0 0.0
    %v670 = vand.u32 %v65, 4294901760
    %v671 = vsub.f32 %v65, %v670
    %v672 = vand.u32 %v671, 4294901760
    %673 = vmatpush1.msra.mxu0 %v672
    %674 = vmatprep.subr.mxu0 0.0
    %675 = vmatpush1.msra.mxu0 0.0
    %676 = vmatprep.subr.mxu0 0.0
    %677 = vmatpush1.msra.mxu0 0.0
    %678 = vmatprep.subr.mxu0 0.0
    %679 = vmatpush1.msra.mxu0 0.0
    %680 = vmatprep.subr.mxu0 0.0
    %681 = vmatpush1.msra.mxu0 0.0
    %682 = vmatprep.subr.mxu0 0.0
    %683 = vmatpush1.msra.mxu0 0.0
    %684 = vmatprep.subr.mxu0 0.0
    %685 = vmatpush1.msra.mxu0 0.0
    %686 = vmatprep.subr.mxu0 0.0
    %687 = vmatpush1.msra.mxu0 0.0
    %688 = vmatprep.subr.mxu0 0.0
    %689 = vmatpush1.msra.mxu0 0.0
    %690 = vmatprep.subr.mxu0 0.0
    %691 = vmatpush1.msra.mxu0 0.0
    %692 = vmatprep.subr.mxu0 0.0
    %693 = vmatpush1.msra.mxu0 0.0
    %694 = vmatprep.subr.mxu0 0.0
    %695 = vmatpush1.msra.mxu0 0.0
    %696 = vmatprep.subr.mxu0 0.0
    %697 = vmatpush1.msra.mxu0 0.0
    %698 = vmatprep.subr.mxu0 0.0
    %699 = vmatpush1.msra.mxu0 0.0
    %700 = vmatprep.subr.mxu0 0.0
    %701 = vmatpush1.msra.mxu0 0.0
    %702 = vmatprep.subr.mxu0 0.0
    %703 = vmatpush1.msra.mxu0 0.0
    %704 = vmatprep.subr.mxu0 0.0
    %705 = vmatpush1.msra.mxu0 0.0
    %706 = vmatprep.mubr.f32.mxu0 0.0
    %v707 = vand.u32 %v46, 4294901760
    %708 = vmatmul.mubr.f32.gmra.mrb[0].mxu0 %v707
    %v709 = vpop.f32.mrb[0].mxu0
    %v710 = vadd.f32 %v567, %v709
    %v711 = vpop.f32.mrb[0].mxu0
    %712 = vmatprep.mubr.f32.mxu0 0.0
    %v713 = vand.u32 %v47, 4294901760
    %714 = vmatmul.mubr.f32.gmra.mrb[0].mxu0 %v713
    %v715 = vpop.f32.mrb[0].mxu0
    %v716 = vadd.f32 %v575, %v715
    %v717 = vpop.f32.mrb[0].mxu0
    %718 = vmatprep.mubr.f32.mxu0 0.0
    %v719 = vand.u32 %v48, 4294901760
    %720 = vmatmul.mubr.f32.gmra.mrb[0].mxu0 %v719
    %v721 = vpop.f32.mrb[0].mxu0
    %v722 = vadd.f32 %v583, %v721
    %v723 = vpop.f32.mrb[0].mxu0
    %724 = vmatprep.mubr.f32.mxu0 0.0
    %v725 = vand.u32 %v49, 4294901760
    %726 = vmatmul.mubr.f32.gmra.mrb[0].mxu0 %v725
    %v727 = vpop.f32.mrb[0].mxu0
    %v728 = vadd.f32 %v591, %v727
    %v729 = vpop.f32.mrb[0].mxu0
    %730 = vdwg.mxu0
    %731 = vmatprep.subr.mxu0 0.0
    %v732 = vand.u32 %v50, 4294901760
    %733 = vmatpush1.msra.mxu0 %v732
    %734 = vmatprep.subr.mxu0 0.0
    %v735 = vand.u32 %v51, 4294901760
    %736 = vmatpush1.msra.mxu0 %v735
    %737 = vmatprep.subr.mxu0 0.0
    %v738 = vand.u32 %v52, 4294901760
    %739 = vmatpush1.msra.mxu0 %v738
    %740 = vmatprep.subr.mxu0 0.0
    %v741 = vand.u32 %v53, 4294901760
    %742 = vmatpush1.msra.mxu0 %v741
    %743 = vmatprep.subr.mxu0 0.0
    %v744 = vand.u32 %v54, 4294901760
    %745 = vmatpush1.msra.mxu0 %v744
    %746 = vmatprep.subr.mxu0 0.0
    %v747 = vand.u32 %v55, 4294901760
    %748 = vmatpush1.msra.mxu0 %v747
    %749 = vmatprep.subr.mxu0 0.0
    %v750 = vand.u32 %v56, 4294901760
    %751 = vmatpush1.msra.mxu0 %v750
    %752 = vmatprep.subr.mxu0 0.0
    %v753 = vand.u32 %v57, 4294901760
    %754 = vmatpush1.msra.mxu0 %v753
    %755 = vmatprep.subr.mxu0 0.0
    %v756 = vand.u32 %v58, 4294901760
    %757 = vmatpush1.msra.mxu0 %v756
    %758 = vmatprep.subr.mxu0 0.0
    %v759 = vand.u32 %v59, 4294901760
    %760 = vmatpush1.msra.mxu0 %v759
    %761 = vmatprep.subr.mxu0 0.0
    %v762 = vand.u32 %v60, 4294901760
    %763 = vmatpush1.msra.mxu0 %v762
    %764 = vmatprep.subr.mxu0 0.0
    %v765 = vand.u32 %v61, 4294901760
    %766 = vmatpush1.msra.mxu0 %v765
    %767 = vmatprep.subr.mxu0 0.0
    %v768 = vand.u32 %v62, 4294901760
    %769 = vmatpush1.msra.mxu0 %v768
    %770 = vmatprep.subr.mxu0 0.0
    %v771 = vand.u32 %v63, 4294901760
    %772 = vmatpush1.msra.mxu0 %v771
    %773 = vmatprep.subr.mxu0 0.0
    %v774 = vand.u32 %v64, 4294901760
    %775 = vmatpush1.msra.mxu0 %v774
    %776 = vmatprep.subr.mxu0 0.0
    %v777 = vand.u32 %v65, 4294901760
    %778 = vmatpush1.msra.mxu0 %v777
    %779 = vmatprep.subr.mxu0 0.0
    %780 = vmatpush1.msra.mxu0 0.0
    %781 = vmatprep.subr.mxu0 0.0
    %782 = vmatpush1.msra.mxu0 0.0
    %783 = vmatprep.subr.mxu0 0.0
    %784 = vmatpush1.msra.mxu0 0.0
    %785 = vmatprep.subr.mxu0 0.0
    %786 = vmatpush1.msra.mxu0 0.0
    %787 = vmatprep.subr.mxu0 0.0
    %788 = vmatpush1.msra.mxu0 0.0
    %789 = vmatprep.subr.mxu0 0.0
    %790 = vmatpush1.msra.mxu0 0.0
    %791 = vmatprep.subr.mxu0 0.0
    %792 = vmatpush1.msra.mxu0 0.0
    %793 = vmatprep.subr.mxu0 0.0
    %794 = vmatpush1.msra.mxu0 0.0
    %795 = vmatprep.subr.mxu0 0.0
    %796 = vmatpush1.msra.mxu0 0.0
    %797 = vmatprep.subr.mxu0 0.0
    %798 = vmatpush1.msra.mxu0 0.0
    %799 = vmatprep.subr.mxu0 0.0
    %800 = vmatpush1.msra.mxu0 0.0
    %801 = vmatprep.subr.mxu0 0.0
    %802 = vmatpush1.msra.mxu0 0.0
    %803 = vmatprep.subr.mxu0 0.0
    %804 = vmatpush1.msra.mxu0 0.0
    %805 = vmatprep.subr.mxu0 0.0
    %806 = vmatpush1.msra.mxu0 0.0
    %807 = vmatprep.subr.mxu0 0.0
    %808 = vmatpush1.msra.mxu0 0.0
    %809 = vmatprep.subr.mxu0 0.0
    %810 = vmatpush1.msra.mxu0 0.0
    %811 = vmatprep.mubr.f32.mxu0 0.0
    %v812 = vand.u32 %v46, 4294901760
    %813 = vmatmul.mubr.f32.gmra.mrb[0].mxu0 %v812
    %v814 = vpop.f32.mrb[0].mxu0
    %v815 = vadd.f32 %v710, %v814
    %v816 = vpop.f32.mrb[0].mxu0
    %817 = vmatprep.mubr.f32.mxu0 0.0
    %v818 = vand.u32 %v47, 4294901760
    %819 = vmatmul.mubr.f32.gmra.mrb[0].mxu0 %v818
    %v820 = vpop.f32.mrb[0].mxu0
    %v821 = vadd.f32 %v716, %v820
    %v822 = vpop.f32.mrb[0].mxu0
    %823 = vmatprep.mubr.f32.mxu0 0.0
    %v824 = vand.u32 %v48, 4294901760
    %825 = vmatmul.mubr.f32.gmra.mrb[0].mxu0 %v824
    %v826 = vpop.f32.mrb[0].mxu0
    %v827 = vadd.f32 %v722, %v826
    %v828 = vpop.f32.mrb[0].mxu0
    %829 = vmatprep.mubr.f32.mxu0 0.0
    %v830 = vand.u32 %v49, 4294901760
    %831 = vmatmul.mubr.f32.gmra.mrb[0].mxu0 %v830
    %v832 = vpop.f32.mrb[0].mxu0
    %v833 = vadd.f32 %v728, %v832
    %v834 = vpop.f32.mrb[0].mxu0
    %835 = vdwg.mxu0
    %v836 = vsub.f32 %v46, %v815
    %v837 = vsub.f32 %v47, %v821
    %v838 = vsub.f32 %v48, %v827
    %v839 = vsub.f32 %v49, %v833
    %v840 = vmul.f32 %v836, %v836
    %v841 = vmul.f32 %v837, %v837
    %v842 = vmul.f32 %v838, %v838
    %v843 = vmul.f32 %v839, %v839
    %844 = vmatprep.subr.mxu0 0.0
    %v845 = vand.u32 %v50, 4294901760
    %846 = vmatpush1.msra.mxu0 %v845
    %847 = vmatprep.subr.mxu0 0.0
    %v848 = vand.u32 %v51, 4294901760
    %849 = vmatpush1.msra.mxu0 %v848
    %850 = vmatprep.subr.mxu0 0.0
    %v851 = vand.u32 %v52, 4294901760
    %852 = vmatpush1.msra.mxu0 %v851
    %853 = vmatprep.subr.mxu0 0.0
    %v854 = vand.u32 %v53, 4294901760
    %855 = vmatpush1.msra.mxu0 %v854
    %856 = vmatprep.subr.mxu0 0.0
    %v857 = vand.u32 %v54, 4294901760
    %858 = vmatpush1.msra.mxu0 %v857
    %859 = vmatprep.subr.mxu0 0.0
    %v860 = vand.u32 %v55, 4294901760
    %861 = vmatpush1.msra.mxu0 %v860
    %862 = vmatprep.subr.mxu0 0.0
    %v863 = vand.u32 %v56, 4294901760
    %864 = vmatpush1.msra.mxu0 %v863
    %865 = vmatprep.subr.mxu0 0.0
    %v866 = vand.u32 %v57, 4294901760
    %867 = vmatpush1.msra.mxu0 %v866
    %868 = vmatprep.subr.mxu0 0.0
    %v869 = vand.u32 %v58, 4294901760
    %870 = vmatpush1.msra.mxu0 %v869
    %871 = vmatprep.subr.mxu0 0.0
    %v872 = vand.u32 %v59, 4294901760
    %873 = vmatpush1.msra.mxu0 %v872
    %874 = vmatprep.subr.mxu0 0.0
    %v875 = vand.u32 %v60, 4294901760
    %876 = vmatpush1.msra.mxu0 %v875
    %877 = vmatprep.subr.mxu0 0.0
    %v878 = vand.u32 %v61, 4294901760
    %879 = vmatpush1.msra.mxu0 %v878
    %880 = vmatprep.subr.mxu0 0.0
    %v881 = vand.u32 %v62, 4294901760
    %882 = vmatpush1.msra.mxu0 %v881
    %883 = vmatprep.subr.mxu0 0.0
    %v884 = vand.u32 %v63, 4294901760
    %885 = vmatpush1.msra.mxu0 %v884
    %886 = vmatprep.subr.mxu0 0.0
    %v887 = vand.u32 %v64, 4294901760
    %888 = vmatpush1.msra.mxu0 %v887
    %889 = vmatprep.subr.mxu0 0.0
    %v890 = vand.u32 %v65, 4294901760
    %891 = vmatpush1.msra.mxu0 %v890
    %892 = vmatprep.subr.mxu0 0.0
    %893 = vmatpush1.msra.mxu0 0.0
    %894 = vmatprep.subr.mxu0 0.0
    %895 = vmatpush1.msra.mxu0 0.0
    %896 = vmatprep.subr.mxu0 0.0
    %897 = vmatpush1.msra.mxu0 0.0
    %898 = vmatprep.subr.mxu0 0.0
    %899 = vmatpush1.msra.mxu0 0.0
    %900 = vmatprep.subr.mxu0 0.0
    %901 = vmatpush1.msra.mxu0 0.0
    %902 = vmatprep.subr.mxu0 0.0
    %903 = vmatpush1.msra.mxu0 0.0
    %904 = vmatprep.subr.mxu0 0.0
    %905 = vmatpush1.msra.mxu0 0.0
    %906 = vmatprep.subr.mxu0 0.0
    %907 = vmatpush1.msra.mxu0 0.0
    %908 = vmatprep.subr.mxu0 0.0
    %909 = vmatpush1.msra.mxu0 0.0
    %910 = vmatprep.subr.mxu0 0.0
    %911 = vmatpush1.msra.mxu0 0.0
    %912 = vmatprep.subr.mxu0 0.0
    %913 = vmatpush1.msra.mxu0 0.0
    %914 = vmatprep.subr.mxu0 0.0
    %915 = vmatpush1.msra.mxu0 0.0
    %916 = vmatprep.subr.mxu0 0.0
    %917 = vmatpush1.msra.mxu0 0.0
    %918 = vmatprep.subr.mxu0 0.0
    %919 = vmatpush1.msra.mxu0 0.0
    %920 = vmatprep.subr.mxu0 0.0
    %921 = vmatpush1.msra.mxu0 0.0
    %922 = vmatprep.subr.mxu0 0.0
    %923 = vmatpush1.msra.mxu0 0.0
    %924 = vmatprep.mubr.f32.mxu0 0.0
    %v925 = vand.u32 %v840, 4294901760
    %v926 = vsub.f32 %v840, %v925
    %v927 = vand.u32 %v926, 4294901760
    %v928 = vsub.f32 %v926, %v927
    %v929 = vand.u32 %v928, 4294901760
    %930 = vmatmul.mubr.f32.gmra.mrb[0].mxu0 %v929
    %v931 = vpop.f32.mrb[0].mxu0
    %v932 = vadd.f32 1e-05, %v931
    %v933 = vpop.f32.mrb[0].mxu0
    %934 = vmatprep.mubr.f32.mxu0 0.0
    %v935 = vand.u32 %v841, 4294901760
    %v936 = vsub.f32 %v841, %v935
    %v937 = vand.u32 %v936, 4294901760
    %v938 = vsub.f32 %v936, %v937
    %v939 = vand.u32 %v938, 4294901760
    %940 = vmatmul.mubr.f32.gmra.mrb[0].mxu0 %v939
    %v941 = vpop.f32.mrb[0].mxu0
    %v942 = vadd.f32 1e-05, %v941
    %v943 = vpop.f32.mrb[0].mxu0
    %944 = vmatprep.mubr.f32.mxu0 0.0
    %v945 = vand.u32 %v842, 4294901760
    %v946 = vsub.f32 %v842, %v945
    %v947 = vand.u32 %v946, 4294901760
    %v948 = vsub.f32 %v946, %v947
    %v949 = vand.u32 %v948, 4294901760
    %950 = vmatmul.mubr.f32.gmra.mrb[0].mxu0 %v949
    %v951 = vpop.f32.mrb[0].mxu0
    %v952 = vadd.f32 1e-05, %v951
    %v953 = vpop.f32.mrb[0].mxu0
    %954 = vmatprep.mubr.f32.mxu0 0.0
    %v955 = vand.u32 %v843, 4294901760
    %v956 = vsub.f32 %v843, %v955
    %v957 = vand.u32 %v956, 4294901760
    %v958 = vsub.f32 %v956, %v957
    %v959 = vand.u32 %v958, 4294901760
    %960 = vmatmul.mubr.f32.gmra.mrb[0].mxu0 %v959
    %v961 = vpop.f32.mrb[0].mxu0
    %v962 = vadd.f32 1e-05, %v961
    %v963 = vpop.f32.mrb[0].mxu0
    %964 = vdwg.mxu0
    %965 = vmatprep.subr.mxu0 0.0
    %v966 = vand.u32 %v50, 4294901760
    %v967 = vsub.f32 %v50, %v966
    %v968 = vand.u32 %v967, 4294901760
    %v969 = vsub.f32 %v967, %v968
    %v970 = vand.u32 %v969, 4294901760
    %971 = vmatpush1.msra.mxu0 %v970
    %972 = vmatprep.subr.mxu0 0.0
    %v973 = vand.u32 %v51, 4294901760
    %v974 = vsub.f32 %v51, %v973
    %v975 = vand.u32 %v974, 4294901760
    %v976 = vsub.f32 %v974, %v975
    %v977 = vand.u32 %v976, 4294901760
    %978 = vmatpush1.msra.mxu0 %v977
    %979 = vmatprep.subr.mxu0 0.0
    %v980 = vand.u32 %v52, 4294901760
    %v981 = vsub.f32 %v52, %v980
    %v982 = vand.u32 %v981, 4294901760
    %v983 = vsub.f32 %v981, %v982
    %v984 = vand.u32 %v983, 4294901760
    %985 = vmatpush1.msra.mxu0 %v984
    %986 = vmatprep.subr.mxu0 0.0
    %v987 = vand.u32 %v53, 4294901760
    %v988 = vsub.f32 %v53, %v987
    %v989 = vand.u32 %v988, 4294901760
    %v990 = vsub.f32 %v988, %v989
    %v991 = vand.u32 %v990, 4294901760
    %992 = vmatpush1.msra.mxu0 %v991
    %993 = vmatprep.subr.mxu0 0.0
    %v994 = vand.u32 %v54, 4294901760
    %v995 = vsub.f32 %v54, %v994
    %v996 = vand.u32 %v995, 4294901760
    %v997 = vsub.f32 %v995, %v996
    %v998 = vand.u32 %v997, 4294901760
    %999 = vmatpush1.msra.mxu0 %v998
    %1000 = vmatprep.subr.mxu0 0.0
    %v1001 = vand.u32 %v55, 4294901760
    %v1002 = vsub.f32 %v55, %v1001
    %v1003 = vand.u32 %v1002, 4294901760
    %v1004 = vsub.f32 %v1002, %v1003
    %v1005 = vand.u32 %v1004, 4294901760
    %1006 = vmatpush1.msra.mxu0 %v1005
    %1007 = vmatprep.subr.mxu0 0.0
    %v1008 = vand.u32 %v56, 4294901760
    %v1009 = vsub.f32 %v56, %v1008
    %v1010 = vand.u32 %v1009, 4294901760
    %v1011 = vsub.f32 %v1009, %v1010
    %v1012 = vand.u32 %v1011, 4294901760
    %1013 = vmatpush1.msra.mxu0 %v1012
    %1014 = vmatprep.subr.mxu0 0.0
    %v1015 = vand.u32 %v57, 4294901760
    %v1016 = vsub.f32 %v57, %v1015
    %v1017 = vand.u32 %v1016, 4294901760
    %v1018 = vsub.f32 %v1016, %v1017
    %v1019 = vand.u32 %v1018, 4294901760
    %1020 = vmatpush1.msra.mxu0 %v1019
    %1021 = vmatprep.subr.mxu0 0.0
    %v1022 = vand.u32 %v58, 4294901760
    %v1023 = vsub.f32 %v58, %v1022
    %v1024 = vand.u32 %v1023, 4294901760
    %v1025 = vsub.f32 %v1023, %v1024
    %v1026 = vand.u32 %v1025, 4294901760
    %1027 = vmatpush1.msra.mxu0 %v1026
    %1028 = vmatprep.subr.mxu0 0.0
    %v1029 = vand.u32 %v59, 4294901760
    %v1030 = vsub.f32 %v59, %v1029
    %v1031 = vand.u32 %v1030, 4294901760
    %v1032 = vsub.f32 %v1030, %v1031
    %v1033 = vand.u32 %v1032, 4294901760
    %1034 = vmatpush1.msra.mxu0 %v1033
    %1035 = vmatprep.subr.mxu0 0.0
    %v1036 = vand.u32 %v60, 4294901760
    %v1037 = vsub.f32 %v60, %v1036
    %v1038 = vand.u32 %v1037, 4294901760
    %v1039 = vsub.f32 %v1037, %v1038
    %v1040 = vand.u32 %v1039, 4294901760
    %1041 = vmatpush1.msra.mxu0 %v1040
    %1042 = vmatprep.subr.mxu0 0.0
    %v1043 = vand.u32 %v61, 4294901760
    %v1044 = vsub.f32 %v61, %v1043
    %v1045 = vand.u32 %v1044, 4294901760
    %v1046 = vsub.f32 %v1044, %v1045
    %v1047 = vand.u32 %v1046, 4294901760
    %1048 = vmatpush1.msra.mxu0 %v1047
    %1049 = vmatprep.subr.mxu0 0.0
    %v1050 = vand.u32 %v62, 4294901760
    %v1051 = vsub.f32 %v62, %v1050
    %v1052 = vand.u32 %v1051, 4294901760
    %v1053 = vsub.f32 %v1051, %v1052
    %v1054 = vand.u32 %v1053, 4294901760
    %1055 = vmatpush1.msra.mxu0 %v1054
    %1056 = vmatprep.subr.mxu0 0.0
    %v1057 = vand.u32 %v63, 4294901760
    %v1058 = vsub.f32 %v63, %v1057
    %v1059 = vand.u32 %v1058, 4294901760
    %v1060 = vsub.f32 %v1058, %v1059
    %v1061 = vand.u32 %v1060, 4294901760
    %1062 = vmatpush1.msra.mxu0 %v1061
    %1063 = vmatprep.subr.mxu0 0.0
    %v1064 = vand.u32 %v64, 4294901760
    %v1065 = vsub.f32 %v64, %v1064
    %v1066 = vand.u32 %v1065, 4294901760
    %v1067 = vsub.f32 %v1065, %v1066
    %v1068 = vand.u32 %v1067, 4294901760
    %1069 = vmatpush1.msra.mxu0 %v1068
    %1070 = vmatprep.subr.mxu0 0.0
    %v1071 = vand.u32 %v65, 4294901760
    %v1072 = vsub.f32 %v65, %v1071
    %v1073 = vand.u32 %v1072, 4294901760
    %v1074 = vsub.f32 %v1072, %v1073
    %v1075 = vand.u32 %v1074, 4294901760
    %1076 = vmatpush1.msra.mxu0 %v1075
    %1077 = vmatprep.subr.mxu0 0.0
    %1078 = vmatpush1.msra.mxu0 0.0
    %1079 = vmatprep.subr.mxu0 0.0
    %1080 = vmatpush1.msra.mxu0 0.0
    %1081 = vmatprep.subr.mxu0 0.0
    %1082 = vmatpush1.msra.mxu0 0.0
    %1083 = vmatprep.subr.mxu0 0.0
    %1084 = vmatpush1.msra.mxu0 0.0
    %1085 = vmatprep.subr.mxu0 0.0
    %1086 = vmatpush1.msra.mxu0 0.0
    %1087 = vmatprep.subr.mxu0 0.0
    %1088 = vmatpush1.msra.mxu0 0.0
    %1089 = vmatprep.subr.mxu0 0.0
    %1090 = vmatpush1.msra.mxu0 0.0
    %1091 = vmatprep.subr.mxu0 0.0
    %1092 = vmatpush1.msra.mxu0 0.0
    %1093 = vmatprep.subr.mxu0 0.0
    %1094 = vmatpush1.msra.mxu0 0.0
    %1095 = vmatprep.subr.mxu0 0.0
    %1096 = vmatpush1.msra.mxu0 0.0
    %1097 = vmatprep.subr.mxu0 0.0
    %1098 = vmatpush1.msra.mxu0 0.0
    %1099 = vmatprep.subr.mxu0 0.0
    %1100 = vmatpush1.msra.mxu0 0.0
    %1101 = vmatprep.subr.mxu0 0.0
    %1102 = vmatpush1.msra.mxu0 0.0
    %1103 = vmatprep.subr.mxu0 0.0
    %1104 = vmatpush1.msra.mxu0 0.0
    %1105 = vmatprep.subr.mxu0 0.0
    %1106 = vmatpush1.msra.mxu0 0.0
    %1107 = vmatprep.subr.mxu0 0.0
    %1108 = vmatpush1.msra.mxu0 0.0
    %1109 = vmatprep.mubr.f32.mxu0 0.0
    %v1110 = vand.u32 %v840, 4294901760
    %1111 = vmatmul.mubr.f32.gmra.mrb[0].mxu0 %v1110
    %v1112 = vpop.f32.mrb[0].mxu0
    %v1113 = vadd.f32 %v932, %v1112
    %v1114 = vpop.f32.mrb[0].mxu0
    %1115 = vmatprep.mubr.f32.mxu0 0.0
    %v1116 = vand.u32 %v841, 4294901760
    %1117 = vmatmul.mubr.f32.gmra.mrb[0].mxu0 %v1116
    %v1118 = vpop.f32.mrb[0].mxu0
    %v1119 = vadd.f32 %v942, %v1118
    %v1120 = vpop.f32.mrb[0].mxu0
    %1121 = vmatprep.mubr.f32.mxu0 0.0
    %v1122 = vand.u32 %v842, 4294901760
    %1123 = vmatmul.mubr.f32.gmra.mrb[0].mxu0 %v1122
    %v1124 = vpop.f32.mrb[0].mxu0
    %v1125 = vadd.f32 %v952, %v1124
    %v1126 = vpop.f32.mrb[0].mxu0
    %1127 = vmatprep.mubr.f32.mxu0 0.0
    %v1128 = vand.u32 %v843, 4294901760
    %1129 = vmatmul.mubr.f32.gmra.mrb[0].mxu0 %v1128
    %v1130 = vpop.f32.mrb[0].mxu0
    %v1131 = vadd.f32 %v962, %v1130
    %v1132 = vpop.f32.mrb[0].mxu0
    %1133 = vdwg.mxu0
    %1134 = vmatprep.subr.mxu0 0.0
    %v1135 = vand.u32 %v50, 4294901760
    %v1136 = vsub.f32 %v50, %v1135
    %1137 = vmatpush1.msra.mxu0 %v1136
    %1138 = vmatprep.subr.mxu0 0.0
    %v1139 = vand.u32 %v51, 4294901760
    %v1140 = vsub.f32 %v51, %v1139
    %1141 = vmatpush1.msra.mxu0 %v1140
    %1142 = vmatprep.subr.mxu0 0.0
    %v1143 = vand.u32 %v52, 4294901760
    %v1144 = vsub.f32 %v52, %v1143
    %1145 = vmatpush1.msra.mxu0 %v1144
    %1146 = vmatprep.subr.mxu0 0.0
    %v1147 = vand.u32 %v53, 4294901760
    %v1148 = vsub.f32 %v53, %v1147
    %1149 = vmatpush1.msra.mxu0 %v1148
    %1150 = vmatprep.subr.mxu0 0.0
    %v1151 = vand.u32 %v54, 4294901760
    %v1152 = vsub.f32 %v54, %v1151
    %1153 = vmatpush1.msra.mxu0 %v1152
    %1154 = vmatprep.subr.mxu0 0.0
    %v1155 = vand.u32 %v55, 4294901760
    %v1156 = vsub.f32 %v55, %v1155
    %1157 = vmatpush1.msra.mxu0 %v1156
    %1158 = vmatprep.subr.mxu0 0.0
    %v1159 = vand.u32 %v56, 4294901760
    %v1160 = vsub.f32 %v56, %v1159
    %1161 = vmatpush1.msra.mxu0 %v1160
    %1162 = vmatprep.subr.mxu0 0.0
    %v1163 = vand.u32 %v57, 4294901760
    %v1164 = vsub.f32 %v57, %v1163
    %1165 = vmatpush1.msra.mxu0 %v1164
    %1166 = vmatprep.subr.mxu0 0.0
    %v1167 = vand.u32 %v58, 4294901760
    %v1168 = vsub.f32 %v58, %v1167
    %1169 = vmatpush1.msra.mxu0 %v1168
    %1170 = vmatprep.subr.mxu0 0.0
    %v1171 = vand.u32 %v59, 4294901760
    %v1172 = vsub.f32 %v59, %v1171
    %1173 = vmatpush1.msra.mxu0 %v1172
    %1174 = vmatprep.subr.mxu0 0.0
    %v1175 = vand.u32 %v60, 4294901760
    %v1176 = vsub.f32 %v60, %v1175
    %1177 = vmatpush1.msra.mxu0 %v1176
    %1178 = vmatprep.subr.mxu0 0.0
    %v1179 = vand.u32 %v61, 4294901760
    %v1180 = vsub.f32 %v61, %v1179
    %1181 = vmatpush1.msra.mxu0 %v1180
    %1182 = vmatprep.subr.mxu0 0.0
    %v1183 = vand.u32 %v62, 4294901760
    %v1184 = vsub.f32 %v62, %v1183
    %1185 = vmatpush1.msra.mxu0 %v1184
    %1186 = vmatprep.subr.mxu0 0.0
    %v1187 = vand.u32 %v63, 4294901760
    %v1188 = vsub.f32 %v63, %v1187
    %1189 = vmatpush1.msra.mxu0 %v1188
    %1190 = vmatprep.subr.mxu0 0.0
    %v1191 = vand.u32 %v64, 4294901760
    %v1192 = vsub.f32 %v64, %v1191
    %1193 = vmatpush1.msra.mxu0 %v1192
    %1194 = vmatprep.subr.mxu0 0.0
    %v1195 = vand.u32 %v65, 4294901760
    %v1196 = vsub.f32 %v65, %v1195
    %1197 = vmatpush1.msra.mxu0 %v1196
    %1198 = vmatprep.subr.mxu0 0.0
    %1199 = vmatpush1.msra.mxu0 0.0
    %1200 = vmatprep.subr.mxu0 0.0
    %1201 = vmatpush1.msra.mxu0 0.0
    %1202 = vmatprep.subr.mxu0 0.0
    %1203 = vmatpush1.msra.mxu0 0.0
    %1204 = vmatprep.subr.mxu0 0.0
    %1205 = vmatpush1.msra.mxu0 0.0
    %1206 = vmatprep.subr.mxu0 0.0
    %1207 = vmatpush1.msra.mxu0 0.0
    %1208 = vmatprep.subr.mxu0 0.0
    %1209 = vmatpush1.msra.mxu0 0.0
    %1210 = vmatprep.subr.mxu0 0.0
    %1211 = vmatpush1.msra.mxu0 0.0
    %1212 = vmatprep.subr.mxu0 0.0
    %1213 = vmatpush1.msra.mxu0 0.0
    %1214 = vmatprep.subr.mxu0 0.0
    %1215 = vmatpush1.msra.mxu0 0.0
    %1216 = vmatprep.subr.mxu0 0.0
    %1217 = vmatpush1.msra.mxu0 0.0
    %1218 = vmatprep.subr.mxu0 0.0
    %1219 = vmatpush1.msra.mxu0 0.0
    %1220 = vmatprep.subr.mxu0 0.0
    %1221 = vmatpush1.msra.mxu0 0.0
    %1222 = vmatprep.subr.mxu0 0.0
    %1223 = vmatpush1.msra.mxu0 0.0
    %1224 = vmatprep.subr.mxu0 0.0
    %1225 = vmatpush1.msra.mxu0 0.0
    %1226 = vmatprep.subr.mxu0 0.0
    %1227 = vmatpush1.msra.mxu0 0.0
    %1228 = vmatprep.subr.mxu0 0.0
    %1229 = vmatpush1.msra.mxu0 0.0
    %1230 = vmatprep.mubr.f32.mxu0 0.0
    %v1231 = vand.u32 %v840, 4294901760
    %v1232 = vsub.f32 %v840, %v1231
    %1233 = vmatmul.mubr.f32.gmra.mrb[0].mxu0 %v1232
    %v1234 = vpop.f32.mrb[0].mxu0
    %v1235 = vadd.f32 %v1113, %v1234
    %v1236 = vpop.f32.mrb[0].mxu0
    %1237 = vmatprep.mubr.f32.mxu0 0.0
    %v1238 = vand.u32 %v841, 4294901760
    %v1239 = vsub.f32 %v841, %v1238
    %1240 = vmatmul.mubr.f32.gmra.mrb[0].mxu0 %v1239
    %v1241 = vpop.f32.mrb[0].mxu0
    %v1242 = vadd.f32 %v1119, %v1241
    %v1243 = vpop.f32.mrb[0].mxu0
    %1244 = vmatprep.mubr.f32.mxu0 0.0
    %v1245 = vand.u32 %v842, 4294901760
    %v1246 = vsub.f32 %v842, %v1245
    %1247 = vmatmul.mubr.f32.gmra.mrb[0].mxu0 %v1246
    %v1248 = vpop.f32.mrb[0].mxu0
    %v1249 = vadd.f32 %v1125, %v1248
    %v1250 = vpop.f32.mrb[0].mxu0
    %1251 = vmatprep.mubr.f32.mxu0 0.0
    %v1252 = vand.u32 %v843, 4294901760
    %v1253 = vsub.f32 %v843, %v1252
    %1254 = vmatmul.mubr.f32.gmra.mrb[0].mxu0 %v1253
    %v1255 = vpop.f32.mrb[0].mxu0
    %v1256 = vadd.f32 %v1131, %v1255
    %v1257 = vpop.f32.mrb[0].mxu0
    %1258 = vdwg.mxu0
    %1259 = vmatprep.subr.mxu0 0.0
    %v1260 = vand.u32 %v50, 4294901760
    %1261 = vmatpush1.msra.mxu0 %v1260
    %1262 = vmatprep.subr.mxu0 0.0
    %v1263 = vand.u32 %v51, 4294901760
    %1264 = vmatpush1.msra.mxu0 %v1263
    %1265 = vmatprep.subr.mxu0 0.0
    %v1266 = vand.u32 %v52, 4294901760
    %1267 = vmatpush1.msra.mxu0 %v1266
    %1268 = vmatprep.subr.mxu0 0.0
    %v1269 = vand.u32 %v53, 4294901760
    %1270 = vmatpush1.msra.mxu0 %v1269
    %1271 = vmatprep.subr.mxu0 0.0
    %v1272 = vand.u32 %v54, 4294901760
    %1273 = vmatpush1.msra.mxu0 %v1272
    %1274 = vmatprep.subr.mxu0 0.0
    %v1275 = vand.u32 %v55, 4294901760
    %1276 = vmatpush1.msra.mxu0 %v1275
    %1277 = vmatprep.subr.mxu0 0.0
    %v1278 = vand.u32 %v56, 4294901760
    %1279 = vmatpush1.msra.mxu0 %v1278
    %1280 = vmatprep.subr.mxu0 0.0
    %v1281 = vand.u32 %v57, 4294901760
    %1282 = vmatpush1.msra.mxu0 %v1281
    %1283 = vmatprep.subr.mxu0 0.0
    %v1284 = vand.u32 %v58, 4294901760
    %1285 = vmatpush1.msra.mxu0 %v1284
    %1286 = vmatprep.subr.mxu0 0.0
    %v1287 = vand.u32 %v59, 4294901760
    %1288 = vmatpush1.msra.mxu0 %v1287
    %1289 = vmatprep.subr.mxu0 0.0
    %v1290 = vand.u32 %v60, 4294901760
    %1291 = vmatpush1.msra.mxu0 %v1290
    %1292 = vmatprep.subr.mxu0 0.0
    %v1293 = vand.u32 %v61, 4294901760
    %1294 = vmatpush1.msra.mxu0 %v1293
    %1295 = vmatprep.subr.mxu0 0.0
    %v1296 = vand.u32 %v62, 4294901760
    %1297 = vmatpush1.msra.mxu0 %v1296
    %1298 = vmatprep.subr.mxu0 0.0
    %v1299 = vand.u32 %v63, 4294901760
    %1300 = vmatpush1.msra.mxu0 %v1299
    %1301 = vmatprep.subr.mxu0 0.0
    %v1302 = vand.u32 %v64, 4294901760
    %1303 = vmatpush1.msra.mxu0 %v1302
    %1304 = vmatprep.subr.mxu0 0.0
    %v1305 = vand.u32 %v65, 4294901760
    %1306 = vmatpush1.msra.mxu0 %v1305
    %1307 = vmatprep.subr.mxu0 0.0
    %1308 = vmatpush1.msra.mxu0 0.0
    %1309 = vmatprep.subr.mxu0 0.0
    %1310 = vmatpush1.msra.mxu0 0.0
    %1311 = vmatprep.subr.mxu0 0.0
    %1312 = vmatpush1.msra.mxu0 0.0
    %1313 = vmatprep.subr.mxu0 0.0
    %1314 = vmatpush1.msra.mxu0 0.0
    %1315 = vmatprep.subr.mxu0 0.0
    %1316 = vmatpush1.msra.mxu0 0.0
    %1317 = vmatprep.subr.mxu0 0.0
    %1318 = vmatpush1.msra.mxu0 0.0
    %1319 = vmatprep.subr.mxu0 0.0
    %1320 = vmatpush1.msra.mxu0 0.0
    %1321 = vmatprep.subr.mxu0 0.0
    %1322 = vmatpush1.msra.mxu0 0.0
    %1323 = vmatprep.subr.mxu0 0.0
    %1324 = vmatpush1.msra.mxu0 0.0
    %1325 = vmatprep.subr.mxu0 0.0
    %1326 = vmatpush1.msra.mxu0 0.0
    %1327 = vmatprep.subr.mxu0 0.0
    %1328 = vmatpush1.msra.mxu0 0.0
    %1329 = vmatprep.subr.mxu0 0.0
    %1330 = vmatpush1.msra.mxu0 0.0
    %1331 = vmatprep.subr.mxu0 0.0
    %1332 = vmatpush1.msra.mxu0 0.0
    %1333 = vmatprep.subr.mxu0 0.0
    %1334 = vmatpush1.msra.mxu0 0.0
    %1335 = vmatprep.subr.mxu0 0.0
    %1336 = vmatpush1.msra.mxu0 0.0
    %1337 = vmatprep.subr.mxu0 0.0
    %1338 = vmatpush1.msra.mxu0 0.0
    %1339 = vmatprep.mubr.f32.mxu0 0.0
    %v1340 = vand.u32 %v840, 4294901760
    %v1341 = vsub.f32 %v840, %v1340
    %v1342 = vand.u32 %v1341, 4294901760
    %1343 = vmatmul.mubr.f32.gmra.mrb[0].mxu0 %v1342
    %v1344 = vpop.f32.mrb[0].mxu0
    %v1345 = vadd.f32 %v1235, %v1344
    %v1346 = vpop.f32.mrb[0].mxu0
    %1347 = vmatprep.mubr.f32.mxu0 0.0
    %v1348 = vand.u32 %v841, 4294901760
    %v1349 = vsub.f32 %v841, %v1348
    %v1350 = vand.u32 %v1349, 4294901760
    %1351 = vmatmul.mubr.f32.gmra.mrb[0].mxu0 %v1350
    %v1352 = vpop.f32.mrb[0].mxu0
    %v1353 = vadd.f32 %v1242, %v1352
    %v1354 = vpop.f32.mrb[0].mxu0
    %1355 = vmatprep.mubr.f32.mxu0 0.0
    %v1356 = vand.u32 %v842, 4294901760
    %v1357 = vsub.f32 %v842, %v1356
    %v1358 = vand.u32 %v1357, 4294901760
    %1359 = vmatmul.mubr.f32.gmra.mrb[0].mxu0 %v1358
    %v1360 = vpop.f32.mrb[0].mxu0
    %v1361 = vadd.f32 %v1249, %v1360
    %v1362 = vpop.f32.mrb[0].mxu0
    %1363 = vmatprep.mubr.f32.mxu0 0.0
    %v1364 = vand.u32 %v843, 4294901760
    %v1365 = vsub.f32 %v843, %v1364
    %v1366 = vand.u32 %v1365, 4294901760
    %1367 = vmatmul.mubr.f32.gmra.mrb[0].mxu0 %v1366
    %v1368 = vpop.f32.mrb[0].mxu0
    %v1369 = vadd.f32 %v1256, %v1368
    %v1370 = vpop.f32.mrb[0].mxu0
    %1371 = vdwg.mxu0
    %1372 = vmatprep.subr.mxu0 0.0
    %v1373 = vand.u32 %v50, 4294901760
    %v1374 = vsub.f32 %v50, %v1373
    %v1375 = vand.u32 %v1374, 4294901760
    %1376 = vmatpush1.msra.mxu0 %v1375
    %1377 = vmatprep.subr.mxu0 0.0
    %v1378 = vand.u32 %v51, 4294901760
    %v1379 = vsub.f32 %v51, %v1378
    %v1380 = vand.u32 %v1379, 4294901760
    %1381 = vmatpush1.msra.mxu0 %v1380
    %1382 = vmatprep.subr.mxu0 0.0
    %v1383 = vand.u32 %v52, 4294901760
    %v1384 = vsub.f32 %v52, %v1383
    %v1385 = vand.u32 %v1384, 4294901760
    %1386 = vmatpush1.msra.mxu0 %v1385
    %1387 = vmatprep.subr.mxu0 0.0
    %v1388 = vand.u32 %v53, 4294901760
    %v1389 = vsub.f32 %v53, %v1388
    %v1390 = vand.u32 %v1389, 4294901760
    %1391 = vmatpush1.msra.mxu0 %v1390
    %1392 = vmatprep.subr.mxu0 0.0
    %v1393 = vand.u32 %v54, 4294901760
    %v1394 = vsub.f32 %v54, %v1393
    %v1395 = vand.u32 %v1394, 4294901760
    %1396 = vmatpush1.msra.mxu0 %v1395
    %1397 = vmatprep.subr.mxu0 0.0
    %v1398 = vand.u32 %v55, 4294901760
    %v1399 = vsub.f32 %v55, %v1398
    %v1400 = vand.u32 %v1399, 4294901760
    %1401 = vmatpush1.msra.mxu0 %v1400
    %1402 = vmatprep.subr.mxu0 0.0
    %v1403 = vand.u32 %v56, 4294901760
    %v1404 = vsub.f32 %v56, %v1403
    %v1405 = vand.u32 %v1404, 4294901760
    %1406 = vmatpush1.msra.mxu0 %v1405
    %1407 = vmatprep.subr.mxu0 0.0
    %v1408 = vand.u32 %v57, 4294901760
    %v1409 = vsub.f32 %v57, %v1408
    %v1410 = vand.u32 %v1409, 4294901760
    %1411 = vmatpush1.msra.mxu0 %v1410
    %1412 = vmatprep.subr.mxu0 0.0
    %v1413 = vand.u32 %v58, 4294901760
    %v1414 = vsub.f32 %v58, %v1413
    %v1415 = vand.u32 %v1414, 4294901760
    %1416 = vmatpush1.msra.mxu0 %v1415
    %1417 = vmatprep.subr.mxu0 0.0
    %v1418 = vand.u32 %v59, 4294901760
    %v1419 = vsub.f32 %v59, %v1418
    %v1420 = vand.u32 %v1419, 4294901760
    %1421 = vmatpush1.msra.mxu0 %v1420
    %1422 = vmatprep.subr.mxu0 0.0
    %v1423 = vand.u32 %v60, 4294901760
    %v1424 = vsub.f32 %v60, %v1423
    %v1425 = vand.u32 %v1424, 4294901760
    %1426 = vmatpush1.msra.mxu0 %v1425
    %1427 = vmatprep.subr.mxu0 0.0
    %v1428 = vand.u32 %v61, 4294901760
    %v1429 = vsub.f32 %v61, %v1428
    %v1430 = vand.u32 %v1429, 4294901760
    %1431 = vmatpush1.msra.mxu0 %v1430
    %1432 = vmatprep.subr.mxu0 0.0
    %v1433 = vand.u32 %v62, 4294901760
    %v1434 = vsub.f32 %v62, %v1433
    %v1435 = vand.u32 %v1434, 4294901760
    %1436 = vmatpush1.msra.mxu0 %v1435
    %1437 = vmatprep.subr.mxu0 0.0
    %v1438 = vand.u32 %v63, 4294901760
    %v1439 = vsub.f32 %v63, %v1438
    %v1440 = vand.u32 %v1439, 4294901760
    %1441 = vmatpush1.msra.mxu0 %v1440
    %1442 = vmatprep.subr.mxu0 0.0
    %v1443 = vand.u32 %v64, 4294901760
    %v1444 = vsub.f32 %v64, %v1443
    %v1445 = vand.u32 %v1444, 4294901760
    %1446 = vmatpush1.msra.mxu0 %v1445
    %1447 = vmatprep.subr.mxu0 0.0
    %v1448 = vand.u32 %v65, 4294901760
    %v1449 = vsub.f32 %v65, %v1448
    %v1450 = vand.u32 %v1449, 4294901760
    %1451 = vmatpush1.msra.mxu0 %v1450
    %1452 = vmatprep.subr.mxu0 0.0
    %1453 = vmatpush1.msra.mxu0 0.0
    %1454 = vmatprep.subr.mxu0 0.0
    %1455 = vmatpush1.msra.mxu0 0.0
    %1456 = vmatprep.subr.mxu0 0.0
    %1457 = vmatpush1.msra.mxu0 0.0
    %1458 = vmatprep.subr.mxu0 0.0
    %1459 = vmatpush1.msra.mxu0 0.0
    %1460 = vmatprep.subr.mxu0 0.0
    %1461 = vmatpush1.msra.mxu0 0.0
    %1462 = vmatprep.subr.mxu0 0.0
    %1463 = vmatpush1.msra.mxu0 0.0
    %1464 = vmatprep.subr.mxu0 0.0
    %1465 = vmatpush1.msra.mxu0 0.0
    %1466 = vmatprep.subr.mxu0 0.0
    %1467 = vmatpush1.msra.mxu0 0.0
    %1468 = vmatprep.subr.mxu0 0.0
    %1469 = vmatpush1.msra.mxu0 0.0
    %1470 = vmatprep.subr.mxu0 0.0
    %1471 = vmatpush1.msra.mxu0 0.0
    %1472 = vmatprep.subr.mxu0 0.0
    %1473 = vmatpush1.msra.mxu0 0.0
    %1474 = vmatprep.subr.mxu0 0.0
    %1475 = vmatpush1.msra.mxu0 0.0
    %1476 = vmatprep.subr.mxu0 0.0
    %1477 = vmatpush1.msra.mxu0 0.0
    %1478 = vmatprep.subr.mxu0 0.0
    %1479 = vmatpush1.msra.mxu0 0.0
    %1480 = vmatprep.subr.mxu0 0.0
    %1481 = vmatpush1.msra.mxu0 0.0
    %1482 = vmatprep.subr.mxu0 0.0
    %1483 = vmatpush1.msra.mxu0 0.0
    %1484 = vmatprep.mubr.f32.mxu0 0.0
    %v1485 = vand.u32 %v840, 4294901760
    %1486 = vmatmul.mubr.f32.gmra.mrb[0].mxu0 %v1485
    %v1487 = vpop.f32.mrb[0].mxu0
    %v1488 = vadd.f32 %v1345, %v1487
    %v1489 = vpop.f32.mrb[0].mxu0
    %1490 = vmatprep.mubr.f32.mxu0 0.0
    %v1491 = vand.u32 %v841, 4294901760
    %1492 = vmatmul.mubr.f32.gmra.mrb[0].mxu0 %v1491
    %v1493 = vpop.f32.mrb[0].mxu0
    %v1494 = vadd.f32 %v1353, %v1493
    %v1495 = vpop.f32.mrb[0].mxu0
    %1496 = vmatprep.mubr.f32.mxu0 0.0
    %v1497 = vand.u32 %v842, 4294901760
    %1498 = vmatmul.mubr.f32.gmra.mrb[0].mxu0 %v1497
    %v1499 = vpop.f32.mrb[0].mxu0
    %v1500 = vadd.f32 %v1361, %v1499
    %v1501 = vpop.f32.mrb[0].mxu0
    %1502 = vmatprep.mubr.f32.mxu0 0.0
    %v1503 = vand.u32 %v843, 4294901760
    %1504 = vmatmul.mubr.f32.gmra.mrb[0].mxu0 %v1503
    %v1505 = vpop.f32.mrb[0].mxu0
    %v1506 = vadd.f32 %v1369, %v1505
    %v1507 = vpop.f32.mrb[0].mxu0
    %1508 = vdwg.mxu0
    %1509 = vmatprep.subr.mxu0 0.0
    %v1510 = vand.u32 %v50, 4294901760
    %1511 = vmatpush1.msra.mxu0 %v1510
    %1512 = vmatprep.subr.mxu0 0.0
    %v1513 = vand.u32 %v51, 4294901760
    %1514 = vmatpush1.msra.mxu0 %v1513
    %1515 = vmatprep.subr.mxu0 0.0
    %v1516 = vand.u32 %v52, 4294901760
    %1517 = vmatpush1.msra.mxu0 %v1516
    %1518 = vmatprep.subr.mxu0 0.0
    %v1519 = vand.u32 %v53, 4294901760
    %1520 = vmatpush1.msra.mxu0 %v1519
    %1521 = vmatprep.subr.mxu0 0.0
    %v1522 = vand.u32 %v54, 4294901760
    %1523 = vmatpush1.msra.mxu0 %v1522
    %1524 = vmatprep.subr.mxu0 0.0
    %v1525 = vand.u32 %v55, 4294901760
    %1526 = vmatpush1.msra.mxu0 %v1525
    %1527 = vmatprep.subr.mxu0 0.0
    %v1528 = vand.u32 %v56, 4294901760
    %1529 = vmatpush1.msra.mxu0 %v1528
    %1530 = vmatprep.subr.mxu0 0.0
    %v1531 = vand.u32 %v57, 4294901760
    %1532 = vmatpush1.msra.mxu0 %v1531
    %1533 = vmatprep.subr.mxu0 0.0
    %v1534 = vand.u32 %v58, 4294901760
    %1535 = vmatpush1.msra.mxu0 %v1534
    %1536 = vmatprep.subr.mxu0 0.0
    %v1537 = vand.u32 %v59, 4294901760
    %1538 = vmatpush1.msra.mxu0 %v1537
    %1539 = vmatprep.subr.mxu0 0.0
    %v1540 = vand.u32 %v60, 4294901760
    %1541 = vmatpush1.msra.mxu0 %v1540
    %1542 = vmatprep.subr.mxu0 0.0
    %v1543 = vand.u32 %v61, 4294901760
    %1544 = vmatpush1.msra.mxu0 %v1543
    %1545 = vmatprep.subr.mxu0 0.0
    %v1546 = vand.u32 %v62, 4294901760
    %1547 = vmatpush1.msra.mxu0 %v1546
    %1548 = vmatprep.subr.mxu0 0.0
    %v1549 = vand.u32 %v63, 4294901760
    %1550 = vmatpush1.msra.mxu0 %v1549
    %1551 = vmatprep.subr.mxu0 0.0
    %v1552 = vand.u32 %v64, 4294901760
    %1553 = vmatpush1.msra.mxu0 %v1552
    %1554 = vmatprep.subr.mxu0 0.0
    %v1555 = vand.u32 %v65, 4294901760
    %1556 = vmatpush1.msra.mxu0 %v1555
    %1557 = vmatprep.subr.mxu0 0.0
    %1558 = vmatpush1.msra.mxu0 0.0
    %1559 = vmatprep.subr.mxu0 0.0
    %1560 = vmatpush1.msra.mxu0 0.0
    %1561 = vmatprep.subr.mxu0 0.0
    %1562 = vmatpush1.msra.mxu0 0.0
    %1563 = vmatprep.subr.mxu0 0.0
    %1564 = vmatpush1.msra.mxu0 0.0
    %1565 = vmatprep.subr.mxu0 0.0
    %1566 = vmatpush1.msra.mxu0 0.0
    %1567 = vmatprep.subr.mxu0 0.0
    %1568 = vmatpush1.msra.mxu0 0.0
    %1569 = vmatprep.subr.mxu0 0.0
    %1570 = vmatpush1.msra.mxu0 0.0
    %1571 = vmatprep.subr.mxu0 0.0
    %1572 = vmatpush1.msra.mxu0 0.0
    %1573 = vmatprep.subr.mxu0 0.0
    %1574 = vmatpush1.msra.mxu0 0.0
    %1575 = vmatprep.subr.mxu0 0.0
    %1576 = vmatpush1.msra.mxu0 0.0
    %1577 = vmatprep.subr.mxu0 0.0
    %1578 = vmatpush1.msra.mxu0 0.0
    %1579 = vmatprep.subr.mxu0 0.0
    %1580 = vmatpush1.msra.mxu0 0.0
    %1581 = vmatprep.subr.mxu0 0.0
    %1582 = vmatpush1.msra.mxu0 0.0
    %1583 = vmatprep.subr.mxu0 0.0
    %1584 = vmatpush1.msra.mxu0 0.0
    %1585 = vmatprep.subr.mxu0 0.0
    %1586 = vmatpush1.msra.mxu0 0.0
    %1587 = vmatprep.subr.mxu0 0.0
    %1588 = vmatpush1.msra.mxu0 0.0
    %1589 = vmatprep.mubr.f32.mxu0 0.0
    %v1590 = vand.u32 %v840, 4294901760
    %1591 = vmatmul.mubr.f32.gmra.mrb[0].mxu0 %v1590
    %v1592 = vpop.f32.mrb[0].mxu0
    %v1593 = vadd.f32 %v1488, %v1592
    %v1594 = vpop.f32.mrb[0].mxu0
    %1595 = vmatprep.mubr.f32.mxu0 0.0
    %v1596 = vand.u32 %v841, 4294901760
    %1597 = vmatmul.mubr.f32.gmra.mrb[0].mxu0 %v1596
    %v1598 = vpop.f32.mrb[0].mxu0
    %v1599 = vadd.f32 %v1494, %v1598
    %v1600 = vpop.f32.mrb[0].mxu0
    %1601 = vmatprep.mubr.f32.mxu0 0.0
    %v1602 = vand.u32 %v842, 4294901760
    %1603 = vmatmul.mubr.f32.gmra.mrb[0].mxu0 %v1602
    %v1604 = vpop.f32.mrb[0].mxu0
    %v1605 = vadd.f32 %v1500, %v1604
    %v1606 = vpop.f32.mrb[0].mxu0
    %1607 = vmatprep.mubr.f32.mxu0 0.0
    %v1608 = vand.u32 %v843, 4294901760
    %1609 = vmatmul.mubr.f32.gmra.mrb[0].mxu0 %v1608
    %v1610 = vpop.f32.mrb[0].mxu0
    %v1611 = vadd.f32 %v1506, %v1610
    %v1612 = vpop.f32.mrb[0].mxu0
    %1613 = vdwg.mxu0
    %v1614 = vrsqrt.pop %v1593
    %v1615 = vrsqrt.pop %v1599
    %v1616 = vrsqrt.pop %v1605
    %v1617 = vrsqrt.pop %v1611
    %v1618 = vmul.f32 %v836, %v1614
    %v1619 = vmul.f32 %v837, %v1615
    %v1620 = vmul.f32 %v838, %v1616
    %v1621 = vmul.f32 %v839, %v1617
    %v1622 = vld [vmem:[%s1] sm:$0x1]
    %v1624 = vlaneseq
    %v1625 = vshrl.u32 %v1624, 7
    %v1626 = vsub.s32 0, %v1625
    %v1627 = vrot.slane %v1622, %v1626
    %v1629 = vmul.f32 %v1618, %v1627
    %v1630 = vmul.f32 %v1619, %v1627
    %v1631 = vmul.f32 %v1620, %v1627
    %v1632 = vmul.f32 %v1621, %v1627
    %v1633 = vld [vmem:[%s2] sm:$0x1]
    %v1635 = vlaneseq
    %v1636 = vshrl.u32 %v1635, 7
    %v1637 = vsub.s32 0, %v1636
    %v1638 = vrot.slane %v1633, %v1637
    %v1640 = vadd.f32 %v1629, %v1638
    %v1641 = vadd.f32 %v1630, %v1638
    %v1642 = vadd.f32 %v1631, %v1638
    %v1643 = vadd.f32 %v1632, %v1638
    %1644 = vst [vmem:[#allocation7] sm:$0xff] %v1640
    %1645 = vst [vmem:[#allocation7 + $0x8] sm:$0xff] %v1641
    %1646 = vst [vmem:[#allocation7 + $0x10] sm:$0xff] %v1642
    %1647 = vst [vmem:[#allocation7 + $0x18] sm:$0xff] %v1643
    // Predicated region
    $region26: #{tpu_custom_call.1} parent=1 // pred_check
      _
    $region27: #{tpu_custom_call.1} parent=1 // pred_check_branch
      %1649 = sbr.rel (0) target = $region29
    $region28: #{tpu_custom_call.1} parent=1 // pred_region
      %s1651 = ssub.s32 512, 512
      %1652 = vsyncadd [#allocation4], %s1651
      %s1653 = sshll.u32 [#allocation7], 4
      %s1654 = int_to_ptr.vmem [resolvable:$true] %s1653
      %1659 = dma.vmem_to_hbm [thread:$0]  %s1654, 512, %s4, [#allocation4], 128, 128, 8
    $region29: #{tpu_custom_call.1} parent=1 // pred_fallthru
      _
    // Predicated region
    $region30: #{tpu_custom_call.1} parent=1 // pred_check
      _
    $region31: #{tpu_custom_call.1} parent=1 // pred_check_branch
      %1661 = sbr.rel (0) target = $region33
    $region32: #{tpu_custom_call.1} parent=1 // pred_region
      %1662 = dma.done [#allocation4], 512
    $region33: #{tpu_custom_call.1} parent=1 // pred_fallthru
      _
    %1663 = vsyncpa [#allocation3], 1
    %1664 = vsyncpa [#allocation6], 1
    %1665 = vsyncpa [#allocation4], 1

</llo_original>
